<compile_context>
chip_gen: v7x
topology: tpu7x:2x2x1
jax: 0.10.0
libtpu: 0.0.40
codegen_flags: <defaults>
</compile_context>

<pallas_src>
import functools

import jax
import jax.numpy as jnp
from jax.experimental import pallas as pl
from jax.experimental.pallas import tpu as pltpu


# -----------------------------------------------------------------------------
# Helpers
# -----------------------------------------------------------------------------
def _rms(x, w, eps):
    # OLMo/Molmo RMSNorm: x * rsqrt(mean(x^2) + eps) * weight   (f32)
    var = jnp.mean(x * x, axis=-1, keepdims=True)
    return (x * jax.lax.rsqrt(var + eps)) * w


def _pick_tile(total, target, multiple=8):
    """Largest divisor of `total` <= target that is a multiple of `multiple`,
    else `total` itself (full extent is always a legal block dim)."""
    if total <= target:
        return total
    t = (target // multiple) * multiple
    while t >= multiple:
        if total % t == 0:
            return t
        t -= multiple
    return total


def _vmem_limit_bytes():
    # Generation-aware VMEM budget: headroom on v7x (64 MiB physical), and do
    # not artificially cap v5e/v6e (128 MiB physical).
    try:
        cap = int(pltpu.get_tpu_info().vmem_capacity_bytes)
    except Exception:
        cap = 128 * 1024 * 1024
    return int(min(cap * 0.85, 100 * 1024 * 1024))


# -----------------------------------------------------------------------------
# Kernel A: RMSNorm + fused QKV + qk-norm + RoPE -> head-major bf16 Q/K/V
# grid: (B, S//tq)
# -----------------------------------------------------------------------------
def qkv_rope_kernel(x_ref, sin_ref, cos_ref,
                    w_attn_norm_ref, w_q_norm_ref, w_k_norm_ref, w_qkv_ref,
                    q_out_ref, k_out_ref, v_out_ref,
                    *, n_heads, n_kv_heads, head_dim, eps, scale):
    q_dim = n_heads * head_dim
    kv_dim = n_kv_heads * head_dim

    x = x_ref[0]                          # [tq, D]  f32
    sin = sin_ref[0]                      # [tq, d]  (rotate-half sign folded in)
    cos = cos_ref[0]                      # [tq, d]

    h = _rms(x, w_attn_norm_ref[0], eps)
    qkv = jnp.dot(h.astype(jnp.bfloat16), w_qkv_ref[...],
                  preferred_element_type=jnp.float32)          # [tq, q+2kv] f32

    # Fold the softmax scale here so Kernel B never rescales per KV step.
    q = _rms(qkv[:, :q_dim], w_q_norm_ref[0], eps) * scale
    k = _rms(qkv[:, q_dim:q_dim + kv_dim], w_k_norm_ref[0], eps)

    def swap_halves(t):
        # rotate_half(t) * sin == swap_halves(t) * signed_sin
        if head_dim % 128 == 0:
            return pltpu.roll(t, shift=head_dim // 2, axis=-1)   # XLU (free slot)
        # Small/test head_dim: plain slice swap (always lowers).
        return jnp.concatenate([t[:, head_dim // 2:], t[:, :head_dim // 2]], axis=-1)

    # Per-head stores directly into head-major [B, H, S, d] bf16 outputs
    # (lane-dense at d=128): no final concat, no wrapper transpose.
    for hh in range(n_heads):
        th = q[:, hh * head_dim:(hh + 1) * head_dim]
        q_out_ref[0, hh] = (th * cos + swap_halves(th) * sin).astype(q_out_ref.dtype)
    for hh in range(n_kv_heads):
        th = k[:, hh * head_dim:(hh + 1) * head_dim]
        k_out_ref[0, hh] = (th * cos + swap_halves(th) * sin).astype(k_out_ref.dtype)
        v0 = q_dim + kv_dim + hh * head_dim
        v_out_ref[0, hh] = qkv[:, v0:v0 + head_dim].astype(v_out_ref.dtype)


# -----------------------------------------------------------------------------
# Kernel B: causal flash attention (GQA, bf16 in / f32 online-softmax state)
# grid: (B, S//tq, S//tk) with the KV axis last ("arbitrary")
# -----------------------------------------------------------------------------
def flash_attn_kernel(q_ref, k_ref, v_ref, att_ref,
                      m_ref, l_ref, acc_ref,
                      *, n_heads, n_kv_heads, head_dim, block_q, block_kv):
    group = n_heads // n_kv_heads
    ki = pl.program_id(2)
    nk = pl.num_programs(2)
    q_start = pl.program_id(1) * block_q
    kv_start = ki * block_kv

    @pl.when(ki == 0)
    def _init():
        m_ref[...] = jnp.full(m_ref.shape, -jnp.inf, jnp.float32)
        l_ref[...] = jnp.zeros(l_ref.shape, jnp.float32)
        acc_ref[...] = jnp.zeros(acc_ref.shape, jnp.float32)

    # Above-diagonal KV tiles: compute skipped here, and their DMA is skipped
    # too because the index_map is clamped to the diagonal tile (wrapper).
    @pl.when(kv_start <= q_start + (block_q - 1))
    def _compute():
        qh = q_ref[0]                     # [H, tq, d]   bf16 (scale already folded)
        kh = k_ref[0]                     # [Hkv, tk, d] bf16
        vh = v_ref[0]
        if group > 1:
            # GQA: broadcast K/V across the query-head group in VMEM (cheap vreg
            # copies) instead of materializing group-x HBM traffic via jnp.repeat.
            kh = jnp.broadcast_to(
                kh[:, None], (n_kv_heads, group, block_kv, head_dim)
            ).reshape(n_heads, block_kv, head_dim)
            vh = jnp.broadcast_to(
                vh[:, None], (n_kv_heads, group, block_kv, head_dim)
            ).reshape(n_heads, block_kv, head_dim)

        s = jnp.einsum('hqd,hkd->hqk', qh, kh,
                       preferred_element_type=jnp.float32)     # [H, tq, tk]

        # In-kernel additive causal bias (no [B,1,S,S] HBM traffic).
        row = q_start + jax.lax.broadcasted_iota(jnp.int32, (block_q, block_kv), 0)
        col = kv_start + jax.lax.broadcasted_iota(jnp.int32, (block_q, block_kv), 1)
        s = s + jnp.where(row >= col, 0.0, -1e9)[None, :, :]

        m_prev = m_ref[...]
        m_new = jnp.maximum(m_prev, jnp.max(s, axis=-1, keepdims=True))
        alpha = jnp.exp(m_prev - m_new)
        p = jnp.exp(s - m_new)
        l_ref[...] = alpha * l_ref[...] + jnp.sum(p, axis=-1, keepdims=True)
        acc_ref[...] = alpha * acc_ref[...] + jnp.einsum(
            'hqk,hkd->hqd', p.astype(jnp.bfloat16), vh,
            preferred_element_type=jnp.float32)
        m_ref[...] = m_new

    @pl.when(ki == nk - 1)
    def _finalize():
        att = acc_ref[...] * pl.reciprocal(l_ref[...], approx=True)  # [H, tq, d]
        # Per-head column stores build a lane-dense [tq, H*d] bf16 slab
        # (no in-kernel transpose; out-proj moved to Kernel C).
        for hh in range(n_heads):
            att_ref[0, :, hh * head_dim:(hh + 1) * head_dim] = (
                att[hh].astype(att_ref.dtype))


# -----------------------------------------------------------------------------
# Kernel C: out-proj (K = H*d, one matmul) + residual + SwiGLU MLP streamed
# over f_hidden tiles + residual.  grid: (B, S//tq, f_hidden//tf)
# -----------------------------------------------------------------------------
def outproj_mlp_kernel(x_ref, att_ref, w_o_ref, w_ff_norm_ref,
                       w_up_ref, w_gate_ref, w_down_ref, out_ref,
                       xattn_ref, h2_ref, acc_ref, *, eps):
    fi = pl.program_id(2)
    nf = pl.num_programs(2)

    @pl.when(fi == 0)
    def _prologue():
        # Single out-projection matmul with K = n_heads*head_dim (fills the
        # 256-deep MXU), then the first residual; cached across f tiles.
        o = jnp.dot(att_ref[0], w_o_ref[...], preferred_element_type=jnp.float32)
        x_attn = x_ref[0] + o
        xattn_ref[...] = x_attn
        h2_ref[...] = _rms(x_attn, w_ff_norm_ref[0], eps).astype(jnp.bfloat16)
        acc_ref[...] = jnp.zeros_like(acc_ref)

    # One f_hidden tile of the SwiGLU MLP; down-proj accumulates into [tq, D].
    h2 = h2_ref[...]
    up = jnp.dot(h2, w_up_ref[...], preferred_element_type=jnp.float32)
    gate = jnp.dot(h2, w_gate_ref[...], preferred_element_type=jnp.float32)
    act = (gate * jax.nn.sigmoid(gate)) * up
    acc_ref[...] += jnp.dot(act.astype(jnp.bfloat16), w_down_ref[...],
                            preferred_element_type=jnp.float32)

    @pl.when(fi == nf - 1)
    def _epilogue():
        out_ref[0] = xattn_ref[...] + acc_ref[...]


# -----------------------------------------------------------------------------
# Wrapper
# -----------------------------------------------------------------------------
def molmo_block(hidden_states, pos_sin, pos_cos, params, *,
                n_heads, n_kv_heads, head_dim, eps=1e-5,
                block_q=None, block_kv=None, block_f=None):
    B, S, D = hidden_states.shape
    q_dim = n_heads * head_dim
    kv_dim = n_kv_heads * head_dim
    f_hidden = params["w_ff_out"].shape[0]
    scale = head_dim ** -0.5
    bf16 = jnp.bfloat16

    if block_q is None:
        block_q = _pick_tile(S, 256)
    if block_kv is None:
        block_kv = _pick_tile(S, 128)          # v5e-friendly (single vst slot)
    if block_f is None:
        block_f = _pick_tile(f_hidden, 512, multiple=128)
    nq, nk, nf = S // block_q, S // block_kv, f_hidden // block_f

    vmem_limit = _vmem_limit_bytes()

    # Fold the rotate_half sign into the sin table (kernel only swaps halves).
    sign = jnp.concatenate([-jnp.ones((head_dim // 2,), jnp.float32),
                            jnp.ones((head_dim // 2,), jnp.float32)])
    pos_sin_signed = pos_sin * sign

    # bf16 weights for MXU matmuls (norm weights stay f32).
    w_qkv_bf = params["w_qkv"].astype(bf16)                 # [D, q+2kv]
    w_o_bf = params["w_o"].astype(bf16)                     # [H*d, D]
    w_up_bf = params["w_ff"][:, :f_hidden].astype(bf16)     # [D, F]
    w_gate_bf = params["w_ff"][:, f_hidden:].astype(bf16)   # [D, F]
    w_down_bf = params["w_ff_out"].astype(bf16)             # [F, D]

    # ---------------- Kernel A: QKV projection + RoPE -> head-major bf16 -----
    kern_a = functools.partial(qkv_rope_kernel, n_heads=n_heads,
                               n_kv_heads=n_kv_heads, head_dim=head_dim,
                               eps=eps, scale=scale)
    a_cost = pl.CostEstimate(
        flops=int(2 * B * S * D * (q_dim + 2 * kv_dim)),
        transcendentals=int(4 * B * S),
        bytes_accessed=int(4 * B * S * D + 2 * B * S * (q_dim + 2 * kv_dim)
                           + 2 * D * (q_dim + 2 * kv_dim) + 8 * B * S * head_dim))

    q_hm, present_k, present_v = pl.pallas_call(
        kern_a,
        out_shape=(jax.ShapeDtypeStruct((B, n_heads, S, head_dim), bf16),
                   jax.ShapeDtypeStruct((B, n_kv_heads, S, head_dim), bf16),
                   jax.ShapeDtypeStruct((B, n_kv_heads, S, head_dim), bf16)),
        grid=(B, nq),
        in_specs=[
            pl.BlockSpec((1, block_q, D), lambda b, i: (b, i, 0)),
            pl.BlockSpec((1, block_q, head_dim), lambda b, i: (b, i, 0)),
            pl.BlockSpec((1, block_q, head_dim), lambda b, i: (b, i, 0)),
            pl.BlockSpec((1, D), lambda b, i: (0, 0)),
            pl.BlockSpec((1, q_dim), lambda b, i: (0, 0)),
            pl.BlockSpec((1, kv_dim), lambda b, i: (0, 0)),
            pl.BlockSpec((D, q_dim + 2 * kv_dim), lambda b, i: (0, 0)),
        ],
        out_specs=[
            pl.BlockSpec((1, n_heads, block_q, head_dim), lambda b, i: (b, 0, i, 0)),
            pl.BlockSpec((1, n_kv_heads, block_q, head_dim), lambda b, i: (b, 0, i, 0)),
            pl.BlockSpec((1, n_kv_heads, block_q, head_dim), lambda b, i: (b, 0, i, 0)),
        ],
        compiler_params=pltpu.CompilerParams(
            dimension_semantics=("parallel", "parallel"),
            vmem_limit_bytes=vmem_limit),
        cost_estimate=a_cost,
    )(hidden_states, pos_sin_signed, pos_cos,
      params["w_attn_norm"], params["w_q_norm"], params["w_k_norm"], w_qkv_bf)

    # ---------------- Kernel B: causal flash attention ----------------------
    kern_b = functools.partial(flash_attn_kernel, n_heads=n_heads,
                               n_kv_heads=n_kv_heads, head_dim=head_dim,
                               block_q=block_q, block_kv=block_kv)

    # Causal clamp: above-diagonal KV tiles alias the diagonal tile, so Pallas
    # sees an unchanged block index and skips their DMA (compute skipped too).
    def kv_index(b, i, j):
        return (b, 0, jnp.minimum(j, ((i + 1) * block_q - 1) // block_kv), 0)

    fetched = sum(min(nk - 1, ((i + 1) * block_q - 1) // block_kv) + 1
                  for i in range(nq))
    b_cost = pl.CostEstimate(
        flops=int(4 * B * n_heads * fetched * block_q * block_kv * head_dim),
        transcendentals=int(B * n_heads * fetched * block_q * block_kv),
        bytes_accessed=int(2 * B * nq * n_heads * block_q * head_dim
                           + 2 * 2 * B * n_kv_heads * fetched * block_kv * head_dim
                           + 2 * B * S * q_dim))

    att_slab = pl.pallas_call(
        kern_b,
        out_shape=jax.ShapeDtypeStruct((B, S, q_dim), bf16),
        grid=(B, nq, nk),
        in_specs=[
            pl.BlockSpec((1, n_heads, block_q, head_dim), lambda b, i, j: (b, 0, i, 0)),
            pl.BlockSpec((1, n_kv_heads, block_kv, head_dim), kv_index),
            pl.BlockSpec((1, n_kv_heads, block_kv, head_dim), kv_index),
        ],
        out_specs=pl.BlockSpec((1, block_q, q_dim), lambda b, i, j: (b, i, 0)),
        scratch_shapes=[
            pltpu.VMEM((n_heads, block_q, 1), jnp.float32),        # running max
            pltpu.VMEM((n_heads, block_q, 1), jnp.float32),        # running sum
            pltpu.VMEM((n_heads, block_q, head_dim), jnp.float32), # accumulator
        ],
        compiler_params=pltpu.CompilerParams(
            dimension_semantics=("parallel", "parallel", "arbitrary"),
            vmem_limit_bytes=vmem_limit),
        cost_estimate=b_cost,
    )(q_hm, present_k, present_v)

    # ---------------- Kernel C: out-proj + residual + streamed SwiGLU MLP ---
    kern_c = functools.partial(outproj_mlp_kernel, eps=eps)
    c_cost = pl.CostEstimate(
        flops=int(2 * B * S * q_dim * D + 6 * B * S * D * f_hidden),
        transcendentals=int(B * S * f_hidden),
        bytes_accessed=int(8 * B * S * D + 2 * B * S * q_dim
                           + B * nq * (2 * q_dim * D + 6 * D * f_hidden)))

    out = pl.pallas_call(
        kern_c,
        out_shape=jax.ShapeDtypeStruct((B, S, D), jnp.float32),
        grid=(B, nq, nf),
        in_specs=[
            pl.BlockSpec((1, block_q, D), lambda b, i, f: (b, i, 0)),
            pl.BlockSpec((1, block_q, q_dim), lambda b, i, f: (b, i, 0)),
            pl.BlockSpec((q_dim, D), lambda b, i, f: (0, 0)),
            pl.BlockSpec((1, D), lambda b, i, f: (0, 0)),
            pl.BlockSpec((D, block_f), lambda b, i, f: (0, f)),
            pl.BlockSpec((D, block_f), lambda b, i, f: (0, f)),
            pl.BlockSpec((block_f, D), lambda b, i, f: (f, 0)),
        ],
        out_specs=pl.BlockSpec((1, block_q, D), lambda b, i, f: (b, i, 0)),
        scratch_shapes=[
            pltpu.VMEM((block_q, D), jnp.float32),   # x + attn  (first residual)
            pltpu.VMEM((block_q, D), bf16),          # rms-normed MLP input
            pltpu.VMEM((block_q, D), jnp.float32),   # down-proj accumulator
        ],
        compiler_params=pltpu.CompilerParams(
            dimension_semantics=("parallel", "parallel", "arbitrary"),
            vmem_limit_bytes=vmem_limit),
        cost_estimate=c_cost,
    )(hidden_states, att_slab, w_o_bf, params["w_ff_norm"],
      w_up_bf, w_gate_bf, w_down_bf)

    return out, present_k, present_v


# -----------------------------------------------------------------------------
# Pure-JAX reference (same mixed-precision policy: bf16 matmul inputs, f32 acc,
# f32 norms/softmax/residuals) -- used only for the sanity check.
# -----------------------------------------------------------------------------
def reference_block(x, pos_sin, pos_cos, params, *,
                    n_heads, n_kv_heads, head_dim, eps=1e-5):
    B, S, D = x.shape
    q_dim = n_heads * head_dim
    kv_dim = n_kv_heads * head_dim
    scale = head_dim ** -0.5
    bf16 = jnp.bfloat16

    def rms(t, w):
        return t * jax.lax.rsqrt(jnp.mean(t * t, -1, keepdims=True) + eps) * w

    def rot_half(t):
        t1, t2 = jnp.split(t, 2, axis=-1)
        return jnp.concatenate([-t2, t1], axis=-1)

    def mm(a, b):
        return jnp.dot(a.astype(bf16), b.astype(bf16),
                       preferred_element_type=jnp.float32)

    h = rms(x, params["w_attn_norm"][0])
    qkv = mm(h, params["w_qkv"])
    q = rms(qkv[..., :q_dim], params["w_q_norm"][0])
    k = rms(qkv[..., q_dim:q_dim + kv_dim], params["w_k_norm"][0])
    v = qkv[..., q_dim + kv_dim:]

    q = q.reshape(B, S, n_heads, head_dim).transpose(0, 2, 1, 3)
    k = k.reshape(B, S, n_kv_heads, head_dim).transpose(0, 2, 1, 3)
    v = v.reshape(B, S, n_kv_heads, head_dim).transpose(0, 2, 1, 3)

    sin = pos_sin[:, None]
    cos = pos_cos[:, None]
    q = q * cos + rot_half(q) * sin
    k = k * cos + rot_half(k) * sin
    present_k, present_v = k, v

    rep = n_heads // n_kv_heads
    kr = jnp.repeat(k, rep, axis=1)
    vr = jnp.repeat(v, rep, axis=1)
    causal = jnp.tril(jnp.ones((S, S), jnp.bool_))
    bias = jnp.where(causal, 0.0, -1e9).astype(jnp.float32)
    s = jnp.einsum("bhqd,bhkd->bhqk", (q * scale).astype(bf16), kr.astype(bf16),
                   preferred_element_type=jnp.float32) + bias
    p = jax.nn.softmax(s, axis=-1)
    att = jnp.einsum("bhqk,bhkd->bhqd", p.astype(bf16), vr.astype(bf16),
                     preferred_element_type=jnp.float32)
    att = att.transpose(0, 2, 1, 3).reshape(B, S, q_dim)
    x = x + mm(att, params["w_o"])

    h2 = rms(x, params["w_ff_norm"][0])
    ff = mm(h2, params["w_ff"])
    f_hidden = params["w_ff_out"].shape[0]
    act = jax.nn.silu(ff[..., f_hidden:]) * ff[..., :f_hidden]
    out = x + mm(act, params["w_ff_out"])
    return out, present_k, present_v


# -----------------------------------------------------------------------------
if __name__ == "__main__":
    # Small synthetic config consistent with the module's forward.
    B, S = 2, 8
    n_heads, n_kv_heads, head_dim = 4, 2, 8
    D = n_heads * head_dim            # 32
    F_HIDDEN = 64                     # SwiGLU hidden size
    MAX_SEQ = 32
    ROPE_THETA = 10000.0
    EPS = 1e-5

    key = jax.random.PRNGKey(0)
    k0, k1, k2, k3, k4 = jax.random.split(key, 5)
    init = 0.05
    params = {
        "w_attn_norm": jnp.ones((1, D), jnp.float32),
        "w_q_norm":    jnp.ones((1, n_heads * head_dim), jnp.float32),
        "w_k_norm":    jnp.ones((1, n_kv_heads * head_dim), jnp.float32),
        "w_qkv":    init * jax.random.normal(
            k0, (D, n_heads * head_dim + 2 * n_kv_heads * head_dim), jnp.float32),
        "w_o":      init * jax.random.normal(k1, (n_heads * head_dim, D), jnp.float32),
        "w_ff_norm": jnp.ones((1, D), jnp.float32),
        "w_ff":     init * jax.random.normal(k2, (D, 2 * F_HIDDEN), jnp.float32),
        "w_ff_out": init * jax.random.normal(k3, (F_HIDDEN, D), jnp.float32),
    }

    hidden_states = jax.random.normal(k4, (B, S, D), jnp.float32)
    position_ids = jnp.broadcast_to(jnp.arange(S, dtype=jnp.int32), (B, S))

    # Rotary tables; gather at position_ids is plain-JAX glue.
    inv_freq = 1.0 / (ROPE_THETA ** (jnp.arange(0, head_dim, 2, dtype=jnp.float32) / head_dim))
    t = jnp.arange(MAX_SEQ, dtype=jnp.float32)
    freqs = jnp.einsum("i,j->ij", t, inv_freq)
    emb = jnp.concatenate([freqs, freqs], axis=-1)           # [MAX_SEQ, head_dim]
    sin_table, cos_table = jnp.sin(emb), jnp.cos(emb)
    pos_sin = sin_table[position_ids]                        # [B, S, head_dim]
    pos_cos = cos_table[position_ids]

    out, present_k, present_v = molmo_block(
        hidden_states, pos_sin, pos_cos, params,
        n_heads=n_heads, n_kv_heads=n_kv_heads, head_dim=head_dim, eps=EPS)
    jax.block_until_ready((out, present_k, present_v))

    ref_out, ref_k, ref_v = reference_block(
        hidden_states, pos_sin, pos_cos, params,
        n_heads=n_heads, n_kv_heads=n_kv_heads, head_dim=head_dim, eps=EPS)

    # Tolerance covers bf16 MXU inputs + bf16 Q/K/V + attention slab storage,
    # flash-softmax reassociation, and the approx reciprocal; both sides follow
    # the same mixed-precision policy.
    assert jnp.allclose(out, ref_out, atol=1e-2, rtol=1e-2)
    assert jnp.allclose(present_k.astype(jnp.float32), ref_k, atol=1e-2, rtol=1e-2)
    assert jnp.allclose(present_v.astype(jnp.float32), ref_v, atol=1e-2, rtol=1e-2)

    print("KERNEL_OK")
</pallas_src>

<mosaic_0001>
module attributes {stable_mosaic.version = 11 : i64} {
  func.func @qkv_rope_kernel(%arg0: i32, %arg1: i32, %arg2: memref<1x8x32xf32, #tpu.memory_space<vmem>>, %arg3: memref<1x8x8xf32, #tpu.memory_space<vmem>>, %arg4: memref<1x8x8xf32, #tpu.memory_space<vmem>>, %arg5: memref<1x32xf32, #tpu.memory_space<vmem>>, %arg6: memref<1x32xf32, #tpu.memory_space<vmem>>, %arg7: memref<1x16xf32, #tpu.memory_space<vmem>>, %arg8: memref<32x64xbf16, #tpu.memory_space<vmem>>, %arg9: memref<1x4x8x8xbf16, #tpu.memory_space<vmem>>, %arg10: memref<1x2x8x8xbf16, #tpu.memory_space<vmem>>, %arg11: memref<1x2x8x8xbf16, #tpu.memory_space<vmem>>) attributes {dimension_semantics = [#tpu.dimension_semantics<parallel>, #tpu.dimension_semantics<parallel>], iteration_bounds = array<i64: 2, 1>, scalar_prefetch = 0 : i64, scratch_operands = 0 : i64, tpu.core_type = #tpu.core_type<tc>, window_params = [{transform_indices = @transform_0, window_bounds = array<i64: 1, 8, 32>}, {transform_indices = @transform_1, window_bounds = array<i64: 1, 8, 8>}, {transform_indices = @transform_2, window_bounds = array<i64: 1, 8, 8>}, {pipeline_mode = #tpu.pipeline_mode<synchronous>, transform_indices = @transform_3, window_bounds = array<i64: 1, 32>}, {pipeline_mode = #tpu.pipeline_mode<synchronous>, transform_indices = @transform_4, window_bounds = array<i64: 1, 32>}, {pipeline_mode = #tpu.pipeline_mode<synchronous>, transform_indices = @transform_5, window_bounds = array<i64: 1, 16>}, {pipeline_mode = #tpu.pipeline_mode<synchronous>, transform_indices = @transform_6, window_bounds = array<i64: 32, 64>}, {transform_indices = @transform_7, window_bounds = array<i64: 1, 4, 8, 8>}, {transform_indices = @transform_8, window_bounds = array<i64: 1, 2, 8, 8>}, {transform_indices = @transform_9, window_bounds = array<i64: 1, 2, 8, 8>}]} {
    %c0 = arith.constant 0 : index
    %c0_0 = arith.constant 0 : index
    %c0_1 = arith.constant 0 : index
    %0 = vector.load %arg2[%c0, %c0_0, %c0_1] : memref<1x8x32xf32, #tpu.memory_space<vmem>>, vector<1x8x32xf32>
    %1 = vector.shape_cast %0 : vector<1x8x32xf32> to vector<8x32xf32>
    %c0_2 = arith.constant 0 : index
    %c0_3 = arith.constant 0 : index
    %c0_4 = arith.constant 0 : index
    %2 = vector.load %arg3[%c0_2, %c0_3, %c0_4] : memref<1x8x8xf32, #tpu.memory_space<vmem>>, vector<1x8x8xf32>
    %3 = vector.shape_cast %2 : vector<1x8x8xf32> to vector<8x8xf32>
    %c0_5 = arith.constant 0 : index
    %c0_6 = arith.constant 0 : index
    %c0_7 = arith.constant 0 : index
    %4 = vector.load %arg4[%c0_5, %c0_6, %c0_7] : memref<1x8x8xf32, #tpu.memory_space<vmem>>, vector<1x8x8xf32>
    %5 = vector.shape_cast %4 : vector<1x8x8xf32> to vector<8x8xf32>
    %c0_8 = arith.constant 0 : index
    %c0_9 = arith.constant 0 : index
    %6 = vector.load %arg5[%c0_8, %c0_9] : memref<1x32xf32, #tpu.memory_space<vmem>>, vector<1x32xf32>
    %7 = vector.shape_cast %6 : vector<1x32xf32> to vector<32xf32>
    %8 = arith.mulf %1, %1 : vector<8x32xf32>
    %cst = arith.constant dense<0.000000e+00> : vector<8xf32>
    %9 = vector.multi_reduction <add>, %8, %cst [1] : vector<8x32xf32> to vector<8xf32>
    %10 = vector.shape_cast %9 : vector<8xf32> to vector<8x1xf32>
    %cst_10 = arith.constant 3.200000e+01 : f32
    %11 = vector.broadcast %cst_10 : f32 to vector<8x1xf32>
    %12 = arith.divf %10, %11 : vector<8x1xf32>
    %cst_11 = arith.constant 9.99999974E-6 : f32
    %13 = vector.broadcast %cst_11 : f32 to vector<8x1xf32>
    %14 = arith.addf %12, %13 : vector<8x1xf32>
    %15 = math.rsqrt %14 : vector<8x1xf32>
    %16 = vector.broadcast %15 : vector<8x1xf32> to vector<8x32xf32>
    %17 = arith.mulf %1, %16 : vector<8x32xf32>
    %18 = vector.shape_cast %7 : vector<32xf32> to vector<1x32xf32>
    %19 = vector.broadcast %18 : vector<1x32xf32> to vector<8x32xf32>
    %20 = arith.mulf %17, %19 : vector<8x32xf32>
    %21 = arith.truncf %20 : vector<8x32xf32> to vector<8x32xbf16>
    %c0_12 = arith.constant 0 : index
    %c0_13 = arith.constant 0 : index
    %22 = vector.load %arg8[%c0_12, %c0_13] : memref<32x64xbf16, #tpu.memory_space<vmem>>, vector<32x64xbf16>
    %cst_14 = arith.constant dense<0.000000e+00> : vector<8x64xf32>
    %23 = tpu.matmul %21, %22, %cst_14 {dimension_numbers = #tpu.dot_dimension_numbers<[1], [0], [0], [1], [0, 0, 1, 1], [], []>} : vector<8x32xbf16>, vector<32x64xbf16>, vector<8x64xf32> -> vector<8x64xf32>
    %24 = vector.extract_strided_slice %23 {offsets = [0, 0], sizes = [8, 32], strides = [1, 1]} : vector<8x64xf32> to vector<8x32xf32>
    %c0_15 = arith.constant 0 : index
    %c0_16 = arith.constant 0 : index
    %25 = vector.load %arg6[%c0_15, %c0_16] : memref<1x32xf32, #tpu.memory_space<vmem>>, vector<1x32xf32>
    %26 = vector.shape_cast %25 : vector<1x32xf32> to vector<32xf32>
    %27 = arith.mulf %24, %24 : vector<8x32xf32>
    %cst_17 = arith.constant dense<0.000000e+00> : vector<8xf32>
    %28 = vector.multi_reduction <add>, %27, %cst_17 [1] : vector<8x32xf32> to vector<8xf32>
    %29 = vector.shape_cast %28 : vector<8xf32> to vector<8x1xf32>
    %cst_18 = arith.constant 3.200000e+01 : f32
    %30 = vector.broadcast %cst_18 : f32 to vector<8x1xf32>
    %31 = arith.divf %29, %30 : vector<8x1xf32>
    %cst_19 = arith.constant 9.99999974E-6 : f32
    %32 = vector.broadcast %cst_19 : f32 to vector<8x1xf32>
    %33 = arith.addf %31, %32 : vector<8x1xf32>
    %34 = math.rsqrt %33 : vector<8x1xf32>
    %35 = vector.broadcast %34 : vector<8x1xf32> to vector<8x32xf32>
    %36 = arith.mulf %24, %35 : vector<8x32xf32>
    %37 = vector.shape_cast %26 : vector<32xf32> to vector<1x32xf32>
    %38 = vector.broadcast %37 : vector<1x32xf32> to vector<8x32xf32>
    %39 = arith.mulf %36, %38 : vector<8x32xf32>
    %cst_20 = arith.constant 0.353553385 : f32
    %40 = vector.broadcast %cst_20 : f32 to vector<8x32xf32>
    %41 = arith.mulf %39, %40 : vector<8x32xf32>
    %42 = vector.extract_strided_slice %23 {offsets = [0, 32], sizes = [8, 16], strides = [1, 1]} : vector<8x64xf32> to vector<8x16xf32>
    %c0_21 = arith.constant 0 : index
    %c0_22 = arith.constant 0 : index
    %43 = vector.load %arg7[%c0_21, %c0_22] : memref<1x16xf32, #tpu.memory_space<vmem>>, vector<1x16xf32>
    %44 = vector.shape_cast %43 : vector<1x16xf32> to vector<16xf32>
    %45 = arith.mulf %42, %42 : vector<8x16xf32>
    %cst_23 = arith.constant dense<0.000000e+00> : vector<8xf32>
    %46 = vector.multi_reduction <add>, %45, %cst_23 [1] : vector<8x16xf32> to vector<8xf32>
    %47 = vector.shape_cast %46 : vector<8xf32> to vector<8x1xf32>
    %cst_24 = arith.constant 1.600000e+01 : f32
    %48 = vector.broadcast %cst_24 : f32 to vector<8x1xf32>
    %49 = arith.divf %47, %48 : vector<8x1xf32>
    %cst_25 = arith.constant 9.99999974E-6 : f32
    %50 = vector.broadcast %cst_25 : f32 to vector<8x1xf32>
    %51 = arith.addf %49, %50 : vector<8x1xf32>
    %52 = math.rsqrt %51 : vector<8x1xf32>
    %53 = vector.broadcast %52 : vector<8x1xf32> to vector<8x16xf32>
    %54 = arith.mulf %42, %53 : vector<8x16xf32>
    %55 = vector.shape_cast %44 : vector<16xf32> to vector<1x16xf32>
    %56 = vector.broadcast %55 : vector<1x16xf32> to vector<8x16xf32>
    %57 = arith.mulf %54, %56 : vector<8x16xf32>
    %58 = vector.extract_strided_slice %41 {offsets = [0, 0], sizes = [8, 8], strides = [1, 1]} : vector<8x32xf32> to vector<8x8xf32>
    %59 = arith.mulf %58, %5 : vector<8x8xf32>
    %60 = vector.extract_strided_slice %58 {offsets = [0, 4], sizes = [8, 4], strides = [1, 1]} : vector<8x8xf32> to vector<8x4xf32>
    %61 = vector.extract_strided_slice %58 {offsets = [0, 0], sizes = [8, 4], strides = [1, 1]} : vector<8x8xf32> to vector<8x4xf32>
    %62 = tpu.concatenate %60, %61 in 1 : vector<8x4xf32>, vector<8x4xf32> -> vector<8x8xf32>
    %63 = arith.mulf %62, %3 : vector<8x8xf32>
    %64 = arith.addf %59, %63 : vector<8x8xf32>
    %65 = arith.truncf %64 : vector<8x8xf32> to vector<8x8xbf16>
    %c0_26 = arith.constant 0 : index
    %c0_27 = arith.constant 0 : index
    %c0_28 = arith.constant 0 : index
    %c0_29 = arith.constant 0 : index
    %66 = vector.load %arg9[%c0_26, %c0_27, %c0_28, %c0_29] : memref<1x4x8x8xbf16, #tpu.memory_space<vmem>>, vector<1x1x8x8xbf16>
    %67 = vector.shape_cast %66 : vector<1x1x8x8xbf16> to vector<8x8xbf16>
    %68 = vector.shape_cast %65 : vector<8x8xbf16> to vector<1x1x8x8xbf16>
    tpu.vector_store %arg9[%c0_26, %c0_27, %c0_28, %c0_29], %68 {strides = array<i32>} : memref<1x4x8x8xbf16, #tpu.memory_space<vmem>>, vector<1x1x8x8xbf16>,
    %69 = vector.extract_strided_slice %41 {offsets = [0, 8], sizes = [8, 8], strides = [1, 1]} : vector<8x32xf32> to vector<8x8xf32>
    %70 = arith.mulf %69, %5 : vector<8x8xf32>
    %71 = vector.extract_strided_slice %69 {offsets = [0, 4], sizes = [8, 4], strides = [1, 1]} : vector<8x8xf32> to vector<8x4xf32>
    %72 = vector.extract_strided_slice %69 {offsets = [0, 0], sizes = [8, 4], strides = [1, 1]} : vector<8x8xf32> to vector<8x4xf32>
    %73 = tpu.concatenate %71, %72 in 1 : vector<8x4xf32>, vector<8x4xf32> -> vector<8x8xf32>
    %74 = arith.mulf %73, %3 : vector<8x8xf32>
    %75 = arith.addf %70, %74 : vector<8x8xf32>
    %76 = arith.truncf %75 : vector<8x8xf32> to vector<8x8xbf16>
    %c0_30 = arith.constant 0 : index
    %c1 = arith.constant 1 : index
    %c0_31 = arith.constant 0 : index
    %c0_32 = arith.constant 0 : index
    %77 = vector.load %arg9[%c0_30, %c1, %c0_31, %c0_32] : memref<1x4x8x8xbf16, #tpu.memory_space<vmem>>, vector<1x1x8x8xbf16>
    %78 = vector.shape_cast %77 : vector<1x1x8x8xbf16> to vector<8x8xbf16>
    %79 = vector.shape_cast %76 : vector<8x8xbf16> to vector<1x1x8x8xbf16>
    tpu.vector_store %arg9[%c0_30, %c1, %c0_31, %c0_32], %79 {strides = array<i32>} : memref<1x4x8x8xbf16, #tpu.memory_space<vmem>>, vector<1x1x8x8xbf16>,
    %80 = vector.extract_strided_slice %41 {offsets = [0, 16], sizes = [8, 8], strides = [1, 1]} : vector<8x32xf32> to vector<8x8xf32>
    %81 = arith.mulf %80, %5 : vector<8x8xf32>
    %82 = vector.extract_strided_slice %80 {offsets = [0, 4], sizes = [8, 4], strides = [1, 1]} : vector<8x8xf32> to vector<8x4xf32>
    %83 = vector.extract_strided_slice %80 {offsets = [0, 0], sizes = [8, 4], strides = [1, 1]} : vector<8x8xf32> to vector<8x4xf32>
    %84 = tpu.concatenate %82, %83 in 1 : vector<8x4xf32>, vector<8x4xf32> -> vector<8x8xf32>
    %85 = arith.mulf %84, %3 : vector<8x8xf32>
    %86 = arith.addf %81, %85 : vector<8x8xf32>
    %87 = arith.truncf %86 : vector<8x8xf32> to vector<8x8xbf16>
    %c0_33 = arith.constant 0 : index
    %c2 = arith.constant 2 : index
    %c0_34 = arith.constant 0 : index
    %c0_35 = arith.constant 0 : index
    %88 = vector.load %arg9[%c0_33, %c2, %c0_34, %c0_35] : memref<1x4x8x8xbf16, #tpu.memory_space<vmem>>, vector<1x1x8x8xbf16>
    %89 = vector.shape_cast %88 : vector<1x1x8x8xbf16> to vector<8x8xbf16>
    %90 = vector.shape_cast %87 : vector<8x8xbf16> to vector<1x1x8x8xbf16>
    tpu.vector_store %arg9[%c0_33, %c2, %c0_34, %c0_35], %90 {strides = array<i32>} : memref<1x4x8x8xbf16, #tpu.memory_space<vmem>>, vector<1x1x8x8xbf16>,
    %91 = vector.extract_strided_slice %41 {offsets = [0, 24], sizes = [8, 8], strides = [1, 1]} : vector<8x32xf32> to vector<8x8xf32>
    %92 = arith.mulf %91, %5 : vector<8x8xf32>
    %93 = vector.extract_strided_slice %91 {offsets = [0, 4], sizes = [8, 4], strides = [1, 1]} : vector<8x8xf32> to vector<8x4xf32>
    %94 = vector.extract_strided_slice %91 {offsets = [0, 0], sizes = [8, 4], strides = [1, 1]} : vector<8x8xf32> to vector<8x4xf32>
    %95 = tpu.concatenate %93, %94 in 1 : vector<8x4xf32>, vector<8x4xf32> -> vector<8x8xf32>
    %96 = arith.mulf %95, %3 : vector<8x8xf32>
    %97 = arith.addf %92, %96 : vector<8x8xf32>
    %98 = arith.truncf %97 : vector<8x8xf32> to vector<8x8xbf16>
    %c0_36 = arith.constant 0 : index
    %c3 = arith.constant 3 : index
    %c0_37 = arith.constant 0 : index
    %c0_38 = arith.constant 0 : index
    %99 = vector.load %arg9[%c0_36, %c3, %c0_37, %c0_38] : memref<1x4x8x8xbf16, #tpu.memory_space<vmem>>, vector<1x1x8x8xbf16>
    %100 = vector.shape_cast %99 : vector<1x1x8x8xbf16> to vector<8x8xbf16>
    %101 = vector.shape_cast %98 : vector<8x8xbf16> to vector<1x1x8x8xbf16>
    tpu.vector_store %arg9[%c0_36, %c3, %c0_37, %c0_38], %101 {strides = array<i32>} : memref<1x4x8x8xbf16, #tpu.memory_space<vmem>>, vector<1x1x8x8xbf16>,
    %102 = vector.extract_strided_slice %57 {offsets = [0, 0], sizes = [8, 8], strides = [1, 1]} : vector<8x16xf32> to vector<8x8xf32>
    %103 = arith.mulf %102, %5 : vector<8x8xf32>
    %104 = vector.extract_strided_slice %102 {offsets = [0, 4], sizes = [8, 4], strides = [1, 1]} : vector<8x8xf32> to vector<8x4xf32>
    %105 = vector.extract_strided_slice %102 {offsets = [0, 0], sizes = [8, 4], strides = [1, 1]} : vector<8x8xf32> to vector<8x4xf32>
    %106 = tpu.concatenate %104, %105 in 1 : vector<8x4xf32>, vector<8x4xf32> -> vector<8x8xf32>
    %107 = arith.mulf %106, %3 : vector<8x8xf32>
    %108 = arith.addf %103, %107 : vector<8x8xf32>
    %109 = arith.truncf %108 : vector<8x8xf32> to vector<8x8xbf16>
    %c0_39 = arith.constant 0 : index
    %c0_40 = arith.constant 0 : index
    %c0_41 = arith.constant 0 : index
    %c0_42 = arith.constant 0 : index
    %110 = vector.load %arg10[%c0_39, %c0_40, %c0_41, %c0_42] : memref<1x2x8x8xbf16, #tpu.memory_space<vmem>>, vector<1x1x8x8xbf16>
    %111 = vector.shape_cast %110 : vector<1x1x8x8xbf16> to vector<8x8xbf16>
    %112 = vector.shape_cast %109 : vector<8x8xbf16> to vector<1x1x8x8xbf16>
    tpu.vector_store %arg10[%c0_39, %c0_40, %c0_41, %c0_42], %112 {strides = array<i32>} : memref<1x2x8x8xbf16, #tpu.memory_space<vmem>>, vector<1x1x8x8xbf16>,
    %113 = vector.extract_strided_slice %23 {offsets = [0, 48], sizes = [8, 8], strides = [1, 1]} : vector<8x64xf32> to vector<8x8xf32>
    %114 = arith.truncf %113 : vector<8x8xf32> to vector<8x8xbf16>
    %c0_43 = arith.constant 0 : index
    %c0_44 = arith.constant 0 : index
    %c0_45 = arith.constant 0 : index
    %c0_46 = arith.constant 0 : index
    %115 = vector.load %arg11[%c0_43, %c0_44, %c0_45, %c0_46] : memref<1x2x8x8xbf16, #tpu.memory_space<vmem>>, vector<1x1x8x8xbf16>
    %116 = vector.shape_cast %115 : vector<1x1x8x8xbf16> to vector<8x8xbf16>
    %117 = vector.shape_cast %114 : vector<8x8xbf16> to vector<1x1x8x8xbf16>
    tpu.vector_store %arg11[%c0_43, %c0_44, %c0_45, %c0_46], %117 {strides = array<i32>} : memref<1x2x8x8xbf16, #tpu.memory_space<vmem>>, vector<1x1x8x8xbf16>,
    %118 = vector.extract_strided_slice %57 {offsets = [0, 8], sizes = [8, 8], strides = [1, 1]} : vector<8x16xf32> to vector<8x8xf32>
    %119 = arith.mulf %118, %5 : vector<8x8xf32>
    %120 = vector.extract_strided_slice %118 {offsets = [0, 4], sizes = [8, 4], strides = [1, 1]} : vector<8x8xf32> to vector<8x4xf32>
    %121 = vector.extract_strided_slice %118 {offsets = [0, 0], sizes = [8, 4], strides = [1, 1]} : vector<8x8xf32> to vector<8x4xf32>
    %122 = tpu.concatenate %120, %121 in 1 : vector<8x4xf32>, vector<8x4xf32> -> vector<8x8xf32>
    %123 = arith.mulf %122, %3 : vector<8x8xf32>
    %124 = arith.addf %119, %123 : vector<8x8xf32>
    %125 = arith.truncf %124 : vector<8x8xf32> to vector<8x8xbf16>
    %c0_47 = arith.constant 0 : index
    %c1_48 = arith.constant 1 : index
    %c0_49 = arith.constant 0 : index
    %c0_50 = arith.constant 0 : index
    %126 = vector.load %arg10[%c0_47, %c1_48, %c0_49, %c0_50] : memref<1x2x8x8xbf16, #tpu.memory_space<vmem>>, vector<1x1x8x8xbf16>
    %127 = vector.shape_cast %126 : vector<1x1x8x8xbf16> to vector<8x8xbf16>
    %128 = vector.shape_cast %125 : vector<8x8xbf16> to vector<1x1x8x8xbf16>
    tpu.vector_store %arg10[%c0_47, %c1_48, %c0_49, %c0_50], %128 {strides = array<i32>} : memref<1x2x8x8xbf16, #tpu.memory_space<vmem>>, vector<1x1x8x8xbf16>,
    %129 = vector.extract_strided_slice %23 {offsets = [0, 56], sizes = [8, 8], strides = [1, 1]} : vector<8x64xf32> to vector<8x8xf32>
    %130 = arith.truncf %129 : vector<8x8xf32> to vector<8x8xbf16>
    %c0_51 = arith.constant 0 : index
    %c1_52 = arith.constant 1 : index
    %c0_53 = arith.constant 0 : index
    %c0_54 = arith.constant 0 : index
    %131 = vector.load %arg11[%c0_51, %c1_52, %c0_53, %c0_54] : memref<1x2x8x8xbf16, #tpu.memory_space<vmem>>, vector<1x1x8x8xbf16>
    %132 = vector.shape_cast %131 : vector<1x1x8x8xbf16> to vector<8x8xbf16>
    %133 = vector.shape_cast %130 : vector<8x8xbf16> to vector<1x1x8x8xbf16>
    tpu.vector_store %arg11[%c0_51, %c1_52, %c0_53, %c0_54], %133 {strides = array<i32>} : memref<1x2x8x8xbf16, #tpu.memory_space<vmem>>, vector<1x1x8x8xbf16>,
    return
  }
  func.func @transform_0(%arg0: i32, %arg1: i32) -> (i32, i32, i32) {
    %c0_i32 = arith.constant 0 : i32
    %c0_i32_0 = arith.constant 0 : i32
    return %arg0, %arg1, %c0_i32 : i32, i32, i32
  }
  func.func @transform_1(%arg0: i32, %arg1: i32) -> (i32, i32, i32) {
    %c0_i32 = arith.constant 0 : i32
    %c0_i32_0 = arith.constant 0 : i32
    return %arg0, %arg1, %c0_i32 : i32, i32, i32
  }
  func.func @transform_2(%arg0: i32, %arg1: i32) -> (i32, i32, i32) {
    %c0_i32 = arith.constant 0 : i32
    %c0_i32_0 = arith.constant 0 : i32
    return %arg0, %arg1, %c0_i32 : i32, i32, i32
  }
  func.func @transform_3(%arg0: i32, %arg1: i32) -> (i32, i32) {
    %c0_i32 = arith.constant 0 : i32
    %c0_i32_0 = arith.constant 0 : i32
    %c0_i32_1 = arith.constant 0 : i32
    return %c0_i32, %c0_i32_0 : i32, i32
  }
  func.func @transform_4(%arg0: i32, %arg1: i32) -> (i32, i32) {
    %c0_i32 = arith.constant 0 : i32
    %c0_i32_0 = arith.constant 0 : i32
    %c0_i32_1 = arith.constant 0 : i32
    return %c0_i32, %c0_i32_0 : i32, i32
  }
  func.func @transform_5(%arg0: i32, %arg1: i32) -> (i32, i32) {
    %c0_i32 = arith.constant 0 : i32
    %c0_i32_0 = arith.constant 0 : i32
    %c0_i32_1 = arith.constant 0 : i32
    return %c0_i32, %c0_i32_0 : i32, i32
  }
  func.func @transform_6(%arg0: i32, %arg1: i32) -> (i32, i32) {
    %c0_i32 = arith.constant 0 : i32
    %c0_i32_0 = arith.constant 0 : i32
    %c0_i32_1 = arith.constant 0 : i32
    return %c0_i32, %c0_i32_0 : i32, i32
  }
  func.func @transform_7(%arg0: i32, %arg1: i32) -> (i32, i32, i32, i32) {
    %c0_i32 = arith.constant 0 : i32
    %c0_i32_0 = arith.constant 0 : i32
    %c0_i32_1 = arith.constant 0 : i32
    return %arg0, %c0_i32, %arg1, %c0_i32_0 : i32, i32, i32, i32
  }
  func.func @transform_8(%arg0: i32, %arg1: i32) -> (i32, i32, i32, i32) {
    %c0_i32 = arith.constant 0 : i32
    %c0_i32_0 = arith.constant 0 : i32
    %c0_i32_1 = arith.constant 0 : i32
    return %arg0, %c0_i32, %arg1, %c0_i32_0 : i32, i32, i32, i32
  }
  func.func @transform_9(%arg0: i32, %arg1: i32) -> (i32, i32, i32, i32) {
    %c0_i32 = arith.constant 0 : i32
    %c0_i32_0 = arith.constant 0 : i32
    %c0_i32_1 = arith.constant 0 : i32
    return %arg0, %c0_i32, %arg1, %c0_i32_0 : i32, i32, i32, i32
  }
}

</mosaic_0001>

<llo_original>
// kernel: tpu_custom_call.1
$region0: #{tpu_custom_call.1}
  #allocation0 [shape = 'u32[]', space=smem, size = 0x4, offset = 0x4, fixed_abs, tag = 'smem constant byte address 0x4 - core index']
  #allocation1 [shape = 'u32[144,128]{1,0:T(1,128)}', space=vmem, size = 0x12000, scoped, tag = 'internal scratch']
  %s0 = inlined_call_operand.hbm [shape: f32[2,8,32], index: 0, kind: input, shape index: {}]
  %s1 = inlined_call_operand.hbm [shape: f32[2,8,8], index: 1, kind: input, shape index: {}]
  %s2 = inlined_call_operand.hbm [shape: f32[2,8,8], index: 2, kind: input, shape index: {}]
  %s3 = inlined_call_operand.hbm [shape: f32[1,32], index: 3, kind: input, shape index: {}]
  %s4 = inlined_call_operand.hbm [shape: f32[1,32], index: 4, kind: input, shape index: {}]
  %s5 = inlined_call_operand.hbm [shape: f32[1,16], index: 5, kind: input, shape index: {}]
  %s6 = inlined_call_operand.hbm [shape: bf16[32,64], index: 6, kind: input, shape index: {}]
  %s7 = inlined_call_operand.hbm [shape: bf16[2,4,8,8], index: 7, kind: output, shape index: {0}]
  %s8 = inlined_call_operand.hbm [shape: bf16[2,2,8,8], index: 8, kind: output, shape index: {1}]
  %s9 = inlined_call_operand.hbm [shape: bf16[2,2,8,8], index: 9, kind: output, shape index: {2}]
  %10 = xla_tuple %s7, %s8, %s9
  %s11 = sld [smem:[#allocation0]]
  $region105: #{tpu_custom_call.1} parent=0
    _
  %s13 = ssub.s32 1, %s11
  %s14 = scalar_select 0, %s13, %s11
  $region1: #{tpu_custom_call.1} parent=0
    #allocation2 [shape = 'u8[8192]{0}', space=vmem, size = 0x2000, scoped, tag = 'input window, operand 0']
    #allocation3 [shape = 's32[2]{0}', space=sflag, size = 0x8, scoped, tag = 'scoped memory for tpu_custom_call.1']
    #allocation4 [shape = 's32[2]{0}', space=sflag, size = 0x8, scoped, tag = 'scoped memory for tpu_custom_call.1']
    #allocation5 [shape = 'u8[8192]{0}', space=vmem, size = 0x2000, scoped, tag = 'input window, operand 1']
    #allocation6 [shape = 's32[2]{0}', space=sflag, size = 0x8, scoped, tag = 'scoped memory for tpu_custom_call.1']
    #allocation7 [shape = 'u8[8192]{0}', space=vmem, size = 0x2000, scoped, tag = 'input window, operand 2']
    #allocation8 [shape = 'u8[512]{0}', space=vmem, size = 0x400, scoped, tag = 'input window, operand 3, single buffered']
    #allocation9 [shape = 's32[1]{0}', space=sflag, size = 0x4, scoped, tag = 'scoped memory for tpu_custom_call.1']
    #allocation10 [shape = 'u8[512]{0}', space=vmem, size = 0x400, scoped, tag = 'input window, operand 4, single buffered']
    #allocation11 [shape = 'u8[512]{0}', space=vmem, size = 0x400, scoped, tag = 'input window, operand 5, single buffered']
    #allocation12 [shape = 's32[1]{0}', space=sflag, size = 0x4, scoped, tag = 'scoped memory for tpu_custom_call.1']
    #allocation13 [shape = 'u8[8192]{0}', space=vmem, size = 0x2000, scoped, tag = 'input window, operand 6, single buffered']
    #allocation14 [shape = 'u8[16384]{0}', space=vmem, size = 0x4000, scoped, tag = 'output window, operand 0']
    #allocation15 [shape = 'u8[8192]{0}', space=vmem, size = 0x2000, scoped, tag = 'output window, operand 1']
    #allocation16 [shape = 's32[2]{0}', space=sflag, size = 0x8, scoped, tag = 'scoped memory for tpu_custom_call.1']
    #allocation17 [shape = 'u8[8192]{0}', space=vmem, size = 0x2000, scoped, tag = 'output window, operand 2']
    %15 = vsyncpa [#allocation3], 0
    %s16 = scalar_lea.sflag [#allocation3], 1
    %17 = vsyncpa %s16, 0
    %18 = vsyncpa [#allocation6], 0
    %s19 = scalar_lea.sflag [#allocation6], 1
    %20 = vsyncpa %s19, 0
    %21 = vsyncpa [#allocation9], 0
    %22 = vsyncpa [#allocation12], 0
    %23 = vsyncpa [#allocation4], 0
    %s24 = scalar_lea.sflag [#allocation4], 1
    %25 = vsyncpa %s24, 0
    %26 = vsyncpa [#allocation16], 0
    %s27 = scalar_lea.sflag [#allocation16], 1
    %28 = vsyncpa %s27, 0
    loop: start=0, step=1, limit=4
    $region2: #{tpu_custom_call.1} parent=1 // loop_pre_header
      _
    $region3: #{tpu_custom_call.1} parent=1 // loop_header
      %s30 = sphi 0, %s34
      %p31 = scmp.ge.s32.totalorder %s30, 4
      %s37 = sphi 0, %s49
      %s38 = sphi 0, %s45
      %s39 = sphi 0, %s37
      %s40 = sphi 0, %s38
      %s41 = sphi 0, %s39
      %s42 = sphi 0, %s40
      %s54 = sphi 0, %s56
      %s57 = sphi 0, %s54
      %s58 = sphi 0, %s57
      %s74 = sphi 0, %s58
      %s82 = sphi 0, %s84
      %s85 = sphi 0, %s82
      %s86 = sphi 0, %s85
      %s102 = sphi 0, %s86
      %s110 = sphi 0, %s112
      %s113 = sphi 0, %s110
      %s114 = sphi 0, %s113
      %s130 = sphi 0, %s114
      %s134 = sphi 0, %s134
      %s136 = sphi 0, %s134
      %s137 = sphi 0, %s136
      %s151 = sphi 0, %s137
      %s155 = sphi 0, %s155
      %s157 = sphi 0, %s155
      %s158 = sphi 0, %s157
      %s172 = sphi 0, %s158
      %s176 = sphi 0, %s176
      %s178 = sphi 0, %s176
      %s179 = sphi 0, %s178
      %s193 = sphi 0, %s179
      %s197 = sphi 0, %s197
      %s199 = sphi 0, %s197
      %s200 = sphi 0, %s199
      %s214 = sphi 0, %s200
      %s222 = sphi 0, %s224
      %s225 = sphi 0, %s222
      %s226 = sphi 0, %s225
      %s242 = sphi 0, %s226
      %s250 = sphi 0, %s252
      %s253 = sphi 0, %s250
      %s254 = sphi 0, %s253
      %s270 = sphi 0, %s254
      %s278 = sphi 0, %s280
      %s281 = sphi 0, %s278
      %s282 = sphi 0, %s281
      %s298 = sphi 0, %s282
    $region4: #{tpu_custom_call.1} parent=1 // loop_header_branch
      %33 = sbr.rel (%p31) target = $region8
    $region5: #{tpu_custom_call.1} parent=1 // loop_body
      %s35 = ssub.s32 %s30, 1
      %s36 = ssub.s32 %s30, 2
      %s43 = sadd.s32 1, %s38
      %p44 = scmp.ge.s32.totalorder %s43, 1
      %s45 = scalar_select %p44, 0, %s43
      %s46 = sadd.s32 1, %s37
      %s47 = scalar_select %p44, %s46, %s37
      %p48 = scmp.ge.s32.totalorder %s47, 2
      %s49 = scalar_select %p48, 0, %s47
      %s50 = ssub.s32 %s37, %s49
      %s51 = ssub.s32 %s38, %s45
      %s52 = sor.u32 %s50, %s51
      %p53 = scmp.eq.s32.totalorder %s52, 0
      %s55 = sadd.s32 %s54, 1
      %s56 = scalar_select %p53, %s54, %s55
      %p59 = pneg %p53
      %p60 = scmp.eq.s32.totalorder %s30, 1
      %p61 = por %p59, %p60
      %p62 = scmp.ne.s32.totalorder %s54, %s57
      %p63 = scmp.eq.s32.totalorder %s30, 0
      %p64 = por %p62, %p63
      %p65 = scmp.ne.s32.totalorder %s54, %s57
      %p66 = scmp.eq.s32.totalorder %s35, 1
      %p67 = por %p65, %p66
      %p68 = scmp.ne.s32.totalorder %s57, %s58
      %p69 = scmp.eq.s32.totalorder %s35, 0
      %p70 = por %p68, %p69
      %p71 = scmp.ne.s32.totalorder %s57, %s58
      %p72 = scmp.eq.s32.totalorder %s36, 1
      %p73 = por %p71, %p72
      %p75 = scmp.ne.s32.totalorder %s58, %s74
      %p76 = scmp.eq.s32.totalorder %s36, 0
      %p77 = por %p75, %p76
      %s78 = ssub.s32 %s37, %s49
      %s79 = ssub.s32 %s38, %s45
      %s80 = sor.u32 %s78, %s79
      %p81 = scmp.eq.s32.totalorder %s80, 0
      %s83 = sadd.s32 %s82, 1
      %s84 = scalar_select %p81, %s82, %s83
      %p87 = pneg %p81
      %p88 = scmp.eq.s32.totalorder %s30, 1
      %p89 = por %p87, %p88
      %p90 = scmp.ne.s32.totalorder %s82, %s85
      %p91 = scmp.eq.s32.totalorder %s30, 0
      %p92 = por %p90, %p91
      %p93 = scmp.ne.s32.totalorder %s82, %s85
      %p94 = scmp.eq.s32.totalorder %s35, 1
      %p95 = por %p93, %p94
      %p96 = scmp.ne.s32.totalorder %s85, %s86
      %p97 = scmp.eq.s32.totalorder %s35, 0
      %p98 = por %p96, %p97
      %p99 = scmp.ne.s32.totalorder %s85, %s86
      %p100 = scmp.eq.s32.totalorder %s36, 1
      %p101 = por %p99, %p100
      %p103 = scmp.ne.s32.totalorder %s86, %s102
      %p104 = scmp.eq.s32.totalorder %s36, 0
      %p105 = por %p103, %p104
      %s106 = ssub.s32 %s37, %s49
      %s107 = ssub.s32 %s38, %s45
      %s108 = sor.u32 %s106, %s107
      %p109 = scmp.eq.s32.totalorder %s108, 0
      %s111 = sadd.s32 %s110, 1
      %s112 = scalar_select %p109, %s110, %s111
      %p115 = pneg %p109
      %p116 = scmp.eq.s32.totalorder %s30, 1
      %p117 = por %p115, %p116
      %p118 = scmp.ne.s32.totalorder %s110, %s113
      %p119 = scmp.eq.s32.totalorder %s30, 0
      %p120 = por %p118, %p119
      %p121 = scmp.ne.s32.totalorder %s110, %s113
      %p122 = scmp.eq.s32.totalorder %s35, 1
      %p123 = por %p121, %p122
      %p124 = scmp.ne.s32.totalorder %s113, %s114
      %p125 = scmp.eq.s32.totalorder %s35, 0
      %p126 = por %p124, %p125
      %p127 = scmp.ne.s32.totalorder %s113, %s114
      %p128 = scmp.eq.s32.totalorder %s36, 1
      %p129 = por %p127, %p128
      %p131 = scmp.ne.s32.totalorder %s114, %s130
      %p132 = scmp.eq.s32.totalorder %s36, 0
      %p133 = por %p131, %p132
      %s135 = sadd.s32 %s134, 1
      %p138 = scmp.eq.s32.totalorder %s30, 1
      %p139 = scmp.ne.s32.totalorder %s134, %s136
      %p140 = scmp.eq.s32.totalorder %s30, 0
      %p141 = por %p139, %p140
      %p142 = scmp.ne.s32.totalorder %s134, %s136
      %p143 = scmp.eq.s32.totalorder %s35, 1
      %p144 = por %p142, %p143
      %p145 = scmp.ne.s32.totalorder %s136, %s137
      %p146 = scmp.eq.s32.totalorder %s35, 0
      %p147 = por %p145, %p146
      %p148 = scmp.ne.s32.totalorder %s136, %s137
      %p149 = scmp.eq.s32.totalorder %s36, 1
      %p150 = por %p148, %p149
      %p152 = scmp.ne.s32.totalorder %s137, %s151
      %p153 = scmp.eq.s32.totalorder %s36, 0
      %p154 = por %p152, %p153
      %s156 = sadd.s32 %s155, 1
      %p159 = scmp.eq.s32.totalorder %s30, 1
      %p160 = scmp.ne.s32.totalorder %s155, %s157
      %p161 = scmp.eq.s32.totalorder %s30, 0
      %p162 = por %p160, %p161
      %p163 = scmp.ne.s32.totalorder %s155, %s157
      %p164 = scmp.eq.s32.totalorder %s35, 1
      %p165 = por %p163, %p164
      %p166 = scmp.ne.s32.totalorder %s157, %s158
      %p167 = scmp.eq.s32.totalorder %s35, 0
      %p168 = por %p166, %p167
      %p169 = scmp.ne.s32.totalorder %s157, %s158
      %p170 = scmp.eq.s32.totalorder %s36, 1
      %p171 = por %p169, %p170
      %p173 = scmp.ne.s32.totalorder %s158, %s172
      %p174 = scmp.eq.s32.totalorder %s36, 0
      %p175 = por %p173, %p174
      %s177 = sadd.s32 %s176, 1
      %p180 = scmp.eq.s32.totalorder %s30, 1
      %p181 = scmp.ne.s32.totalorder %s176, %s178
      %p182 = scmp.eq.s32.totalorder %s30, 0
      %p183 = por %p181, %p182
      %p184 = scmp.ne.s32.totalorder %s176, %s178
      %p185 = scmp.eq.s32.totalorder %s35, 1
      %p186 = por %p184, %p185
      %p187 = scmp.ne.s32.totalorder %s178, %s179
      %p188 = scmp.eq.s32.totalorder %s35, 0
      %p189 = por %p187, %p188
      %p190 = scmp.ne.s32.totalorder %s178, %s179
      %p191 = scmp.eq.s32.totalorder %s36, 1
      %p192 = por %p190, %p191
      %p194 = scmp.ne.s32.totalorder %s179, %s193
      %p195 = scmp.eq.s32.totalorder %s36, 0
      %p196 = por %p194, %p195
      %s198 = sadd.s32 %s197, 1
      %p201 = scmp.eq.s32.totalorder %s30, 1
      %p202 = scmp.ne.s32.totalorder %s197, %s199
      %p203 = scmp.eq.s32.totalorder %s30, 0
      %p204 = por %p202, %p203
      %p205 = scmp.ne.s32.totalorder %s197, %s199
      %p206 = scmp.eq.s32.totalorder %s35, 1
      %p207 = por %p205, %p206
      %p208 = scmp.ne.s32.totalorder %s199, %s200
      %p209 = scmp.eq.s32.totalorder %s35, 0
      %p210 = por %p208, %p209
      %p211 = scmp.ne.s32.totalorder %s199, %s200
      %p212 = scmp.eq.s32.totalorder %s36, 1
      %p213 = por %p211, %p212
      %p215 = scmp.ne.s32.totalorder %s200, %s214
      %p216 = scmp.eq.s32.totalorder %s36, 0
      %p217 = por %p215, %p216
      %s218 = ssub.s32 %s37, %s49
      %s219 = ssub.s32 %s38, %s45
      %s220 = sor.u32 %s218, %s219
      %p221 = scmp.eq.s32.totalorder %s220, 0
      %s223 = sadd.s32 %s222, 1
      %s224 = scalar_select %p221, %s222, %s223
      %p227 = pneg %p221
      %p228 = scmp.eq.s32.totalorder %s30, 1
      %p229 = por %p227, %p228
      %p230 = scmp.ne.s32.totalorder %s222, %s225
      %p231 = scmp.eq.s32.totalorder %s30, 0
      %p232 = por %p230, %p231
      %p233 = scmp.ne.s32.totalorder %s222, %s225
      %p234 = scmp.eq.s32.totalorder %s35, 1
      %p235 = por %p233, %p234
      %p236 = scmp.ne.s32.totalorder %s225, %s226
      %p237 = scmp.eq.s32.totalorder %s35, 0
      %p238 = por %p236, %p237
      %p239 = scmp.ne.s32.totalorder %s225, %s226
      %p240 = scmp.eq.s32.totalorder %s36, 1
      %p241 = por %p239, %p240
      %p243 = scmp.ne.s32.totalorder %s226, %s242
      %p244 = scmp.eq.s32.totalorder %s36, 0
      %p245 = por %p243, %p244
      %s246 = ssub.s32 %s37, %s49
      %s247 = ssub.s32 %s38, %s45
      %s248 = sor.u32 %s246, %s247
      %p249 = scmp.eq.s32.totalorder %s248, 0
      %s251 = sadd.s32 %s250, 1
      %s252 = scalar_select %p249, %s250, %s251
      %p255 = pneg %p249
      %p256 = scmp.eq.s32.totalorder %s30, 1
      %p257 = por %p255, %p256
      %p258 = scmp.ne.s32.totalorder %s250, %s253
      %p259 = scmp.eq.s32.totalorder %s30, 0
      %p260 = por %p258, %p259
      %p261 = scmp.ne.s32.totalorder %s250, %s253
      %p262 = scmp.eq.s32.totalorder %s35, 1
      %p263 = por %p261, %p262
      %p264 = scmp.ne.s32.totalorder %s253, %s254
      %p265 = scmp.eq.s32.totalorder %s35, 0
      %p266 = por %p264, %p265
      %p267 = scmp.ne.s32.totalorder %s253, %s254
      %p268 = scmp.eq.s32.totalorder %s36, 1
      %p269 = por %p267, %p268
      %p271 = scmp.ne.s32.totalorder %s254, %s270
      %p272 = scmp.eq.s32.totalorder %s36, 0
      %p273 = por %p271, %p272
      %s274 = ssub.s32 %s37, %s49
      %s275 = ssub.s32 %s38, %s45
      %s276 = sor.u32 %s274, %s275
      %p277 = scmp.eq.s32.totalorder %s276, 0
      %s279 = sadd.s32 %s278, 1
      %s280 = scalar_select %p277, %s278, %s279
      %p283 = pneg %p277
      %p284 = scmp.eq.s32.totalorder %s30, 1
      %p285 = por %p283, %p284
      %p286 = scmp.ne.s32.totalorder %s278, %s281
      %p287 = scmp.eq.s32.totalorder %s30, 0
      %p288 = por %p286, %p287
      %p289 = scmp.ne.s32.totalorder %s278, %s281
      %p290 = scmp.eq.s32.totalorder %s35, 1
      %p291 = por %p289, %p290
      %p292 = scmp.ne.s32.totalorder %s281, %s282
      %p293 = scmp.eq.s32.totalorder %s35, 0
      %p294 = por %p292, %p293
      %p295 = scmp.ne.s32.totalorder %s281, %s282
      %p296 = scmp.eq.s32.totalorder %s36, 1
      %p297 = por %p295, %p296
      %p299 = scmp.ne.s32.totalorder %s282, %s298
      %p300 = scmp.eq.s32.totalorder %s36, 0
      %p301 = por %p299, %p300
      %p302 = scmp.le.s32.totalorder 1, %s30
      %p303 = scmp.lt.s32.totalorder %s30, 3
      %p304 = pnand %p302, %p303
      %p305 = pneg %p304
      // Predicated region
      $region9: #{tpu_custom_call.1} parent=5 // pred_check
        _
      $region10: #{tpu_custom_call.1} parent=5 // pred_check_branch
        %307 = sbr.rel (%p304) target = $region12
      $region11: #{tpu_custom_call.1} parent=5 // pred_region
        %s308 = ssub.s32 %s30, 1
        // Predicated region
        $region13: #{tpu_custom_call.1} parent=11 // pred_check
          %p309 = pneg %p147
        $region14: #{tpu_custom_call.1} parent=11 // pred_check_branch
          %311 = sbr.rel (%p309) target = $region16
        $region15: #{tpu_custom_call.1} parent=11 // pred_region
          %s313 = ssub.s32 16, 16
          %314 = vsyncadd [#allocation9], %s313
          %s316 = sshll.u32 [#allocation8], 4
          %s317 = int_to_ptr.vmem [resolvable:$true] %s316
          %319 = dma.hbm_to_vmem [thread:$0]  %s3, 16, %s317, [#allocation9]
        $region16: #{tpu_custom_call.1} parent=11 // pred_fallthru
          _
        // Predicated region
        $region17: #{tpu_custom_call.1} parent=11 // pred_check
          %p320 = pneg %p168
        $region18: #{tpu_custom_call.1} parent=11 // pred_check_branch
          %322 = sbr.rel (%p320) target = $region20
        $region19: #{tpu_custom_call.1} parent=11 // pred_region
          %s324 = ssub.s32 16, 16
          %325 = vsyncadd [#allocation9], %s324
          %s327 = sshll.u32 [#allocation10], 4
          %s328 = int_to_ptr.vmem [resolvable:$true] %s327
          %330 = dma.hbm_to_vmem [thread:$0]  %s4, 16, %s328, [#allocation9]
        $region20: #{tpu_custom_call.1} parent=11 // pred_fallthru
          _
        // Predicated region
        $region21: #{tpu_custom_call.1} parent=11 // pred_check
          %p331 = pneg %p189
        $region22: #{tpu_custom_call.1} parent=11 // pred_check_branch
          %333 = sbr.rel (%p331) target = $region24
        $region23: #{tpu_custom_call.1} parent=11 // pred_region
          %s335 = ssub.s32 16, 16
          %336 = vsyncadd [#allocation12], %s335
          %s338 = sshll.u32 [#allocation11], 4
          %s339 = int_to_ptr.vmem [resolvable:$true] %s338
          %341 = dma.hbm_to_vmem [thread:$0]  %s5, 16, %s339, [#allocation12]
        $region24: #{tpu_custom_call.1} parent=11 // pred_fallthru
          _
        // Predicated region
        $region25: #{tpu_custom_call.1} parent=11 // pred_check
          %p342 = pneg %p210
        $region26: #{tpu_custom_call.1} parent=11 // pred_check_branch
          %344 = sbr.rel (%p342) target = $region28
        $region27: #{tpu_custom_call.1} parent=11 // pred_region
          %s346 = ssub.s32 256, 256
          %347 = vsyncadd [#allocation12], %s346
          %s348 = sshll.u32 [#allocation13], 4
          %s349 = int_to_ptr.vmem [resolvable:$true] %s348
          %354 = dma.hbm_to_vmem [thread:$0]  %s6, 256, %s349, [#allocation12], 64, 64, 4
        $region28: #{tpu_custom_call.1} parent=11 // pred_fallthru
          _
      $region12: #{tpu_custom_call.1} parent=5 // pred_fallthru
        _
      %p355 = scmp.lt.s32.totalorder %s30, 2
      // Predicated region
      $region29: #{tpu_custom_call.1} parent=5 // pred_check
        %p356 = pneg %p355
      $region30: #{tpu_custom_call.1} parent=5 // pred_check_branch
        %358 = sbr.rel (%p356) target = $region32
      $region31: #{tpu_custom_call.1} parent=5 // pred_region
        // Predicated region
        $region33: #{tpu_custom_call.1} parent=31 // pred_check
          %p359 = pneg %p64
        $region34: #{tpu_custom_call.1} parent=31 // pred_check_branch
          %361 = sbr.rel (%p359) target = $region36
        $region35: #{tpu_custom_call.1} parent=31 // pred_region
          %s362 = sand.u32 %s54, 1
          %s363 = scalar_lea.sflag [#allocation3], %s362
          %s364 = sand.u32 %s54, 1
          %s365 = smul.addr %s364, 8
          %s366 = scalar_lea.vmem [#allocation2], %s365
          %s368 = ssub.s32 128, 128
          %369 = vsyncadd %s363, %s368
          %s370 = sadd.s32 %s38, %s37
          %s371 = smul.addr %s370, 128
          %s372 = scalar_lea.hbm %s0, %s371
          %s374 = sshll.u32 %s366, 4
          %s375 = int_to_ptr.vmem [resolvable:$true] %s374
          %377 = dma.hbm_to_vmem [thread:$0]  %s372, 128, %s375, %s363
        $region36: #{tpu_custom_call.1} parent=31 // pred_fallthru
          _
        // Predicated region
        $region37: #{tpu_custom_call.1} parent=31 // pred_check
          %p378 = pneg %p92
        $region38: #{tpu_custom_call.1} parent=31 // pred_check_branch
          %380 = sbr.rel (%p378) target = $region40
        $region39: #{tpu_custom_call.1} parent=31 // pred_region
          %s381 = sand.u32 %s30, 1
          %s382 = scalar_lea.sflag [#allocation6], %s381
          %s383 = sand.u32 %s82, 1
          %s384 = smul.addr %s383, 8
          %s385 = scalar_lea.vmem [#allocation5], %s384
          %s387 = ssub.s32 128, 128
          %388 = vsyncadd %s382, %s387
          %s389 = sadd.s32 %s38, %s37
          %s390 = smul.addr %s389, 128
          %s391 = scalar_lea.hbm %s1, %s390
          %s393 = sshll.u32 %s385, 4
          %s394 = int_to_ptr.vmem [resolvable:$true] %s393
          %396 = dma.hbm_to_vmem [thread:$0]  %s391, 128, %s394, %s382
        $region40: #{tpu_custom_call.1} parent=31 // pred_fallthru
          _
        // Predicated region
        $region41: #{tpu_custom_call.1} parent=31 // pred_check
          %p397 = pneg %p120
        $region42: #{tpu_custom_call.1} parent=31 // pred_check_branch
          %399 = sbr.rel (%p397) target = $region44
        $region43: #{tpu_custom_call.1} parent=31 // pred_region
          %s400 = sand.u32 %s30, 1
          %s401 = scalar_lea.sflag [#allocation6], %s400
          %s402 = sand.u32 %s110, 1
          %s403 = smul.addr %s402, 8
          %s404 = scalar_lea.vmem [#allocation7], %s403
          %s406 = ssub.s32 128, 128
          %407 = vsyncadd %s401, %s406
          %s408 = sadd.s32 %s38, %s37
          %s409 = smul.addr %s408, 128
          %s410 = scalar_lea.hbm %s2, %s409
          %s412 = sshll.u32 %s404, 4
          %s413 = int_to_ptr.vmem [resolvable:$true] %s412
          %415 = dma.hbm_to_vmem [thread:$0]  %s410, 128, %s413, %s401
        $region44: #{tpu_custom_call.1} parent=31 // pred_fallthru
          _
      $region32: #{tpu_custom_call.1} parent=5 // pred_fallthru
        _
      %p416 = scmp.le.s32.totalorder 1, %s30
      %p417 = scmp.lt.s32.totalorder %s30, 3
      %p418 = pnand %p416, %p417
      %p419 = pneg %p418
      // Predicated region
      $region45: #{tpu_custom_call.1} parent=5 // pred_check
        _
      $region46: #{tpu_custom_call.1} parent=5 // pred_check_branch
        %421 = sbr.rel (%p418) target = $region48
      $region47: #{tpu_custom_call.1} parent=5 // pred_region
        %s422 = ssub.s32 %s30, 1
        %s423 = sand.u32 %s57, 1
        %s424 = scalar_lea.sflag [#allocation3], %s423
        %s425 = sand.u32 %s57, 1
        %s426 = smul.addr %s425, 8
        %s427 = scalar_lea.vmem [#allocation2], %s426
        // Predicated region
        $region49: #{tpu_custom_call.1} parent=47 // pred_check
          %p428 = pneg %p70
        $region50: #{tpu_custom_call.1} parent=47 // pred_check_branch
          %430 = sbr.rel (%p428) target = $region52
        $region51: #{tpu_custom_call.1} parent=47 // pred_region
          %431 = dma.done %s424, 128
        $region52: #{tpu_custom_call.1} parent=47 // pred_fallthru
          _
        %s432 = sand.u32 %s35, 1
        %s433 = scalar_lea.sflag [#allocation6], %s432
        %s434 = sand.u32 %s85, 1
        %s435 = smul.addr %s434, 8
        %s436 = scalar_lea.vmem [#allocation5], %s435
        // Predicated region
        $region53: #{tpu_custom_call.1} parent=47 // pred_check
          %p437 = pneg %p98
        $region54: #{tpu_custom_call.1} parent=47 // pred_check_branch
          %439 = sbr.rel (%p437) target = $region56
        $region55: #{tpu_custom_call.1} parent=47 // pred_region
          %440 = dma.done %s433, 128
        $region56: #{tpu_custom_call.1} parent=47 // pred_fallthru
          _
        %s441 = sand.u32 %s35, 1
        %s442 = scalar_lea.sflag [#allocation6], %s441
        %s443 = sand.u32 %s113, 1
        %s444 = smul.addr %s443, 8
        %s445 = scalar_lea.vmem [#allocation7], %s444
        // Predicated region
        $region57: #{tpu_custom_call.1} parent=47 // pred_check
          %p446 = pneg %p126
        $region58: #{tpu_custom_call.1} parent=47 // pred_check_branch
          %448 = sbr.rel (%p446) target = $region60
        $region59: #{tpu_custom_call.1} parent=47 // pred_region
          %449 = dma.done %s442, 128
        $region60: #{tpu_custom_call.1} parent=47 // pred_fallthru
          _
        // Predicated region
        $region61: #{tpu_custom_call.1} parent=47 // pred_check
          %p450 = pneg %p147
        $region62: #{tpu_custom_call.1} parent=47 // pred_check_branch
          %452 = sbr.rel (%p450) target = $region64
        $region63: #{tpu_custom_call.1} parent=47 // pred_region
          %453 = dma.done [#allocation9], 16
        $region64: #{tpu_custom_call.1} parent=47 // pred_fallthru
          _
        // Predicated region
        $region65: #{tpu_custom_call.1} parent=47 // pred_check
          %p454 = pneg %p168
        $region66: #{tpu_custom_call.1} parent=47 // pred_check_branch
          %456 = sbr.rel (%p454) target = $region68
        $region67: #{tpu_custom_call.1} parent=47 // pred_region
          %457 = dma.done [#allocation9], 16
        $region68: #{tpu_custom_call.1} parent=47 // pred_fallthru
          _
        // Predicated region
        $region69: #{tpu_custom_call.1} parent=47 // pred_check
          %p458 = pneg %p189
        $region70: #{tpu_custom_call.1} parent=47 // pred_check_branch
          %460 = sbr.rel (%p458) target = $region72
        $region71: #{tpu_custom_call.1} parent=47 // pred_region
          %461 = dma.done [#allocation12], 16
        $region72: #{tpu_custom_call.1} parent=47 // pred_fallthru
          _
        // Predicated region
        $region73: #{tpu_custom_call.1} parent=47 // pred_check
          %p462 = pneg %p210
        $region74: #{tpu_custom_call.1} parent=47 // pred_check_branch
          %464 = sbr.rel (%p462) target = $region76
        $region75: #{tpu_custom_call.1} parent=47 // pred_region
          %465 = dma.done [#allocation12], 256
        $region76: #{tpu_custom_call.1} parent=47 // pred_fallthru
          _
        %s466 = sand.u32 %s57, 1
        %s467 = scalar_lea.sflag [#allocation3], %s466
        %s468 = sand.u32 %s57, 1
        %s469 = smul.addr %s468, 8
        %s470 = scalar_lea.vmem [#allocation2], %s469
        %p471 = pneg %p70
        %p472 = pneg %p67
        %s473 = sand.u32 %s35, 1
        %s474 = scalar_lea.sflag [#allocation6], %s473
        %s475 = sand.u32 %s85, 1
        %s476 = smul.addr %s475, 8
        %s477 = scalar_lea.vmem [#allocation5], %s476
        %p478 = pneg %p98
        %p479 = pneg %p95
        %s480 = sand.u32 %s35, 1
        %s481 = scalar_lea.sflag [#allocation6], %s480
        %s482 = sand.u32 %s113, 1
        %s483 = smul.addr %s482, 8
        %s484 = scalar_lea.vmem [#allocation7], %s483
        %p485 = pneg %p126
        %p486 = pneg %p123
        %p487 = pneg %p147
        %p488 = pneg %p144
        %p489 = pneg %p168
        %p490 = pneg %p165
        %p491 = pneg %p189
        %p492 = pneg %p186
        %p493 = pneg %p210
        %p494 = pneg %p207
        %p495 = pneg %p238
        %p496 = pneg %p235
        %s497 = sand.u32 %s225, 1
        %s498 = scalar_lea.sflag [#allocation4], %s497
        %s499 = sand.u32 %s225, 1
        %s500 = smul.addr %s499, 16
        %s501 = scalar_lea.vmem [#allocation14], %s500
        %p502 = pneg %p266
        %p503 = pneg %p263
        %s504 = sand.u32 %s35, 1
        %s505 = scalar_lea.sflag [#allocation16], %s504
        %s506 = sand.u32 %s253, 1
        %s507 = smul.addr %s506, 8
        %s508 = scalar_lea.vmem [#allocation15], %s507
        %p509 = pneg %p294
        %p510 = pneg %p291
        %s511 = sand.u32 %s35, 1
        %s512 = scalar_lea.sflag [#allocation16], %s511
        %s513 = sand.u32 %s281, 1
        %s514 = smul.addr %s513, 8
        %s515 = scalar_lea.vmem [#allocation17], %s514
        %v517 = vld [vmem:[%s427] sm:$0xff]
        %v518 = vld [vmem:[%s436] sm:$0xff]
        %v519 = vld [vmem:[%s445] sm:$0xff]
        %v520 = vld [vmem:[#allocation8] sm:$0x1]
        %v521 = vmul.f32 %v517, %v517
        %vm522 = vcmask 261120
        %v523 = vsel %vm522, %v521, 0.0
        %524 = vadd.xlane.f32.xlu0 %v523
        %v525 = vpop.xlane.xlu0 %524
        %v526 = vrcp.pop 32.0
        %v527 = vmul.f32 %v525, %v526
        %v528 = vadd.f32 %v527, 1e-05
        %v529 = vrsqrt.pop %v528
        %v530 = vmul.f32 %v517, %v529
        %v532 = vlaneseq
        %v533 = vshrl.u32 %v532, 7
        %v534 = vsub.s32 0, %v533
        %v535 = vrot.slane %v520, %v534
        %v537 = vmul.f32 %v530, %v535
        %v538 = vpack.c.bf16 %v537, %v537
        %v539 = vld [vmem:[#allocation13] sm:$0xf]
        %v540 = vld [vmem:[#allocation13 + $0x4] sm:$0xf]
        %v541 = vld [vmem:[#allocation13 + $0x8] sm:$0xf]
        %v542 = vld [vmem:[#allocation13 + $0xc] sm:$0xf]
        %v547 = vunpack.c.l.b16 %v539
        %v548 = vunpack.c.l.b16 %v540
        %v549 = vunpack.c.l.b16 %v541
        %v550 = vunpack.c.l.b16 %v542
        %v551 = vpack.c.b16 %v548, %v547
        %v552 = vpack.c.b16 %v550, %v549
        %v556 = vsel %vm522, %v538, 0
        %558 = vmatprep.subr.bf16.mxu0 0
        %559 = vmatpush1.bf16.msra.mxu0 %v551
        %560 = vmatprep.subr.bf16.mxu0 0
        %561 = vmatpush1.bf16.msra.mxu0 %v552
        %562 = vmatprep.subr.bf16.mxu0 0
        %563 = vmatpush1.bf16.msra.mxu0 0
        %564 = vmatprep.subr.bf16.mxu0 0
        %565 = vmatpush1.bf16.msra.mxu0 0
        %566 = vmatprep.subr.bf16.mxu0 0
        %567 = vmatpush1.bf16.msra.mxu0 0
        %568 = vmatprep.subr.bf16.mxu0 0
        %569 = vmatpush1.bf16.msra.mxu0 0
        %570 = vmatprep.subr.bf16.mxu0 0
        %571 = vmatpush1.bf16.msra.mxu0 0
        %572 = vmatprep.subr.bf16.mxu0 0
        %573 = vmatpush1.bf16.msra.mxu0 0
        %574 = vmatprep.subr.bf16.mxu0 0
        %575 = vmatpush1.bf16.msra.mxu0 0
        %576 = vmatprep.subr.bf16.mxu0 0
        %577 = vmatpush1.bf16.msra.mxu0 0
        %578 = vmatprep.subr.bf16.mxu0 0
        %579 = vmatpush1.bf16.msra.mxu0 0
        %580 = vmatprep.subr.bf16.mxu0 0
        %581 = vmatpush1.bf16.msra.mxu0 0
        %582 = vmatprep.subr.bf16.mxu0 0
        %583 = vmatpush1.bf16.msra.mxu0 0
        %584 = vmatprep.subr.bf16.mxu0 0
        %585 = vmatpush1.bf16.msra.mxu0 0
        %586 = vmatprep.subr.bf16.mxu0 0
        %587 = vmatpush1.bf16.msra.mxu0 0
        %588 = vmatprep.subr.bf16.mxu0 0
        %589 = vmatpush1.bf16.msra.mxu0 0
        %590 = vmatprep.mubr.bf16.mxu0 0
        %591 = vmatmul.mubr.bf16.gmra.mrb[0].mxu0 %v556
        %v592 = vpop.f32.mrb[0].mxu0
        %v593 = vadd.f32 0.0, %v592
        %v594 = vpop.f32.mrb[0].mxu0
        %v595 = vpop.f32.mrb[0].mxu0
        %v596 = vpop.f32.mrb[0].mxu0
        %597 = vdwg.mxu0
        %v598 = vld [vmem:[#allocation10] sm:$0x1]
        %v599 = vmul.f32 %v593, %v593
        %v600 = vsel %vm522, %v599, 0.0
        %601 = vadd.xlane.f32.xlu0 %v600
        %v602 = vpop.xlane.xlu0 %601
        %v603 = vmul.f32 %v602, %v526
        %v604 = vadd.f32 %v603, 1e-05
        %v605 = vrsqrt.pop %v604
        %v606 = vmul.f32 %v593, %v605
        %v608 = vlaneseq
        %v609 = vshrl.u32 %v608, 7
        %v610 = vsub.s32 0, %v609
        %v611 = vrot.slane %v598, %v610
        %v613 = vmul.f32 %v606, %v611
        %v614 = vmul.f32 %v613, 0.35355338
        %v615 = vld [vmem:[#allocation11] sm:$0x1]
        %617 = vrot.lane.b32.xlu0 %v599, 96
        %v618 = vpop.permute.xlu0 %617
        %vm620 = vcmask 130048
        %v621 = vsel %vm620, %v618, 0.0
        %622 = vadd.xlane.f32.xlu0 %v621
        %v623 = vpop.xlane.xlu0 %622
        %v624 = vrcp.pop 16.0
        %v625 = vmul.f32 %v623, %v624
        %v626 = vadd.f32 %v625, 1e-05
        %v627 = vrsqrt.pop %v626
        %v628 = vmul.f32 %v593, %v627
        %v630 = vlaneseq
        %v631 = vshrl.u32 %v630, 7
        %v632 = vsub.s32 0, %v631
        %v633 = vrot.slane %v615, %v632
        %634 = vrot.lane.b32.xlu0 %v633, 32
        %v635 = vpop.permute.xlu0 %634
        %v637 = vmul.f32 %v628, %v635
        %v638 = vmul.f32 %v614, %v519
        %640 = vrot.lane.b32.xlu0 %v614, 124
        %v641 = vpop.permute.xlu0 %640
        %643 = vrot.lane.b32.xlu0 %v614, 4
        %v644 = vpop.permute.xlu0 %643
        %vm646 = vcmask 31744
        %v647 = vsel %vm646, %v641, %v644
        %v648 = vmul.f32 %v647, %v518
        %v649 = vadd.f32 %v638, %v648
        %v650 = vpack.c.bf16 %v649, %v649
        %vm651 = vcmask 60416
        %652 = vst.msk [vmem:[%s501] sm:$0xf] %vm651, %v650
        %654 = vrot.lane.b32.xlu0 %v519, 8
        %v655 = vpop.permute.xlu0 %654
        %v657 = vmul.f32 %v614, %v655
        %658 = vrot.lane.b32.xlu0 %v614, 116
        %v659 = vpop.permute.xlu0 %658
        %v661 = vsel %vm646, %v659, %v641
        %v662 = vmul.f32 %v661, %v518
        %664 = vrot.lane.b32.xlu0 %v662, 8
        %v665 = vpop.permute.xlu0 %664
        %v667 = vadd.f32 %v657, %v665
        %v668 = vpack.c.bf16 %v667, %v667
        %v670 = vunpack.c.l.b16 %v668
        %v671 = vpack.c.b16 %v670, %v670
        %672 = vrot.lane.b32.xlu0 %v671, 120
        %v673 = vpop.permute.xlu0 %672
        %s675 = scalar_lea.vmem %s501, 4 [#allocation14]
        %676 = vst.msk [vmem:[%s675] sm:$0xf] %vm651, %v673
        %677 = vrot.lane.b32.xlu0 %v519, 16
        %v678 = vpop.permute.xlu0 %677
        %v680 = vmul.f32 %v614, %v678
        %681 = vrot.lane.b32.xlu0 %v614, 108
        %v682 = vpop.permute.xlu0 %681
        %v684 = vsel %vm646, %v682, %v659
        %v685 = vmul.f32 %v684, %v518
        %687 = vrot.lane.b32.xlu0 %v685, 16
        %v688 = vpop.permute.xlu0 %687
        %v690 = vadd.f32 %v680, %v688
        %v691 = vpack.c.bf16 %v690, %v690
        %v693 = vunpack.c.l.b16 %v691
        %v694 = vpack.c.b16 %v693, %v693
        %695 = vrot.lane.b32.xlu0 %v694, 112
        %v696 = vpop.permute.xlu0 %695
        %s698 = scalar_lea.vmem %s501, 8 [#allocation14]
        %699 = vst.msk [vmem:[%s698] sm:$0xf] %vm651, %v696
        %700 = vrot.lane.b32.xlu0 %v519, 24
        %v701 = vpop.permute.xlu0 %700
        %v703 = vmul.f32 %v614, %v701
        %704 = vrot.lane.b32.xlu0 %v614, 100
        %v705 = vpop.permute.xlu0 %704
        %v707 = vsel %vm646, %v705, %v682
        %v708 = vmul.f32 %v707, %v518
        %710 = vrot.lane.b32.xlu0 %v708, 24
        %v711 = vpop.permute.xlu0 %710
        %v713 = vadd.f32 %v703, %v711
        %v714 = vpack.c.bf16 %v713, %v713
        %v716 = vunpack.c.l.b16 %v714
        %v717 = vpack.c.b16 %v716, %v716
        %718 = vrot.lane.b32.xlu0 %v717, 104
        %v719 = vpop.permute.xlu0 %718
        %s721 = scalar_lea.vmem %s501, 12 [#allocation14]
        %722 = vst.msk [vmem:[%s721] sm:$0xf] %vm651, %v719
        %723 = vrot.lane.b32.xlu0 %v519, 32
        %v724 = vpop.permute.xlu0 %723
        %v726 = vmul.f32 %v637, %v724
        %728 = vrot.lane.b32.xlu0 %v637, 92
        %v729 = vpop.permute.xlu0 %728
        %731 = vrot.lane.b32.xlu0 %v637, 100
        %v732 = vpop.permute.xlu0 %731
        %v734 = vsel %vm646, %v729, %v732
        %v735 = vmul.f32 %v734, %v518
        %737 = vrot.lane.b32.xlu0 %v735, 32
        %v738 = vpop.permute.xlu0 %737
        %v740 = vadd.f32 %v726, %v738
        %v741 = vpack.c.bf16 %v740, %v740
        %v743 = vunpack.c.l.b16 %v741
        %v744 = vpack.c.b16 %v743, %v743
        %745 = vrot.lane.b32.xlu0 %v744, 96
        %v746 = vpop.permute.xlu0 %745
        %748 = vst.msk [vmem:[%s508] sm:$0xf] %vm651, %v746
        %v749 = vpack.c.bf16 %v593, %v593
        %v751 = vunpack.c.l.b16 %v749
        %v752 = vpack.c.b16 %v751, %v751
        %753 = vrot.lane.b32.xlu0 %v752, 80
        %v754 = vpop.permute.xlu0 %753
        %756 = vst.msk [vmem:[%s515] sm:$0xf] %vm651, %v754
        %757 = vrot.lane.b32.xlu0 %v519, 40
        %v758 = vpop.permute.xlu0 %757
        %v760 = vmul.f32 %v637, %v758
        %761 = vrot.lane.b32.xlu0 %v637, 84
        %v762 = vpop.permute.xlu0 %761
        %v764 = vsel %vm646, %v762, %v729
        %v765 = vmul.f32 %v764, %v518
        %767 = vrot.lane.b32.xlu0 %v765, 40
        %v768 = vpop.permute.xlu0 %767
        %v770 = vadd.f32 %v760, %v768
        %v771 = vpack.c.bf16 %v770, %v770
        %v773 = vunpack.c.l.b16 %v771
        %v774 = vpack.c.b16 %v773, %v773
        %775 = vrot.lane.b32.xlu0 %v774, 88
        %v776 = vpop.permute.xlu0 %775
        %s778 = scalar_lea.vmem %s508, 4 [#allocation15]
        %779 = vst.msk [vmem:[%s778] sm:$0xf] %vm651, %v776
        %780 = vrot.lane.b32.xlu0 %v752, 72
        %v781 = vpop.permute.xlu0 %780
        %s783 = scalar_lea.vmem %s515, 4 [#allocation17]
        %784 = vst.msk [vmem:[%s783] sm:$0xf] %vm651, %v781
        %s785 = sand.u32 %s225, 1
        %s786 = scalar_lea.sflag [#allocation4], %s785
        %s787 = sand.u32 %s225, 1
        %s788 = smul.addr %s787, 16
        %s789 = scalar_lea.vmem [#allocation14], %s788
        %s790 = sand.u32 %s35, 1
        %s791 = scalar_lea.sflag [#allocation16], %s790
        %s792 = sand.u32 %s253, 1
        %s793 = smul.addr %s792, 8
        %s794 = scalar_lea.vmem [#allocation15], %s793
        %s795 = sand.u32 %s35, 1
        %s796 = scalar_lea.sflag [#allocation16], %s795
        %s797 = sand.u32 %s281, 1
        %s798 = smul.addr %s797, 8
        %s799 = scalar_lea.vmem [#allocation17], %s798
        // Predicated region
        $region77: #{tpu_custom_call.1} parent=47 // pred_check
          %p800 = pneg %p235
        $region78: #{tpu_custom_call.1} parent=47 // pred_check_branch
          %802 = sbr.rel (%p800) target = $region80
        $region79: #{tpu_custom_call.1} parent=47 // pred_region
          %s804 = ssub.s32 256, 256
          %805 = vsyncadd %s786, %s804
          %s806 = smul.addr %s39, 4
          %s807 = sadd.s32 %s40, %s806
          %s808 = smul.addr %s807, 64
          %s809 = scalar_lea.hbm %s7, %s808
          %s810 = sshll.u32 %s789, 4
          %s811 = int_to_ptr.vmem [resolvable:$true] %s810
          %816 = dma.vmem_to_hbm [thread:$0]  %s811, 256, %s809, %s786, 64, 64, 4
        $region80: #{tpu_custom_call.1} parent=47 // pred_fallthru
          _
        // Predicated region
        $region81: #{tpu_custom_call.1} parent=47 // pred_check
          %p817 = pneg %p263
        $region82: #{tpu_custom_call.1} parent=47 // pred_check_branch
          %819 = sbr.rel (%p817) target = $region84
        $region83: #{tpu_custom_call.1} parent=47 // pred_region
          %s821 = ssub.s32 128, 128
          %822 = vsyncadd %s791, %s821
          %s823 = smul.addr %s39, 2
          %s824 = sadd.s32 %s40, %s823
          %s825 = smul.addr %s824, 64
          %s826 = scalar_lea.hbm %s8, %s825
          %s827 = sshll.u32 %s794, 4
          %s828 = int_to_ptr.vmem [resolvable:$true] %s827
          %833 = dma.vmem_to_hbm [thread:$0]  %s828, 128, %s826, %s791, 64, 64, 4
        $region84: #{tpu_custom_call.1} parent=47 // pred_fallthru
          _
        // Predicated region
        $region85: #{tpu_custom_call.1} parent=47 // pred_check
          %p834 = pneg %p291
        $region86: #{tpu_custom_call.1} parent=47 // pred_check_branch
          %836 = sbr.rel (%p834) target = $region88
        $region87: #{tpu_custom_call.1} parent=47 // pred_region
          %s838 = ssub.s32 128, 128
          %839 = vsyncadd %s796, %s838
          %s840 = smul.addr %s39, 2
          %s841 = sadd.s32 %s40, %s840
          %s842 = smul.addr %s841, 64
          %s843 = scalar_lea.hbm %s9, %s842
          %s844 = sshll.u32 %s799, 4
          %s845 = int_to_ptr.vmem [resolvable:$true] %s844
          %850 = dma.vmem_to_hbm [thread:$0]  %s845, 128, %s843, %s796, 64, 64, 4
        $region88: #{tpu_custom_call.1} parent=47 // pred_fallthru
          _
      $region48: #{tpu_custom_call.1} parent=5 // pred_fallthru
        _
      %p851 = scmp.le.s32.totalorder 2, %s30
      // Predicated region
      $region89: #{tpu_custom_call.1} parent=5 // pred_check
        %p852 = pneg %p851
      $region90: #{tpu_custom_call.1} parent=5 // pred_check_branch
        %854 = sbr.rel (%p852) target = $region92
      $region91: #{tpu_custom_call.1} parent=5 // pred_region
        %s855 = ssub.s32 %s30, 2
        // Predicated region
        $region93: #{tpu_custom_call.1} parent=91 // pred_check
          %p856 = pneg %p241
        $region94: #{tpu_custom_call.1} parent=91 // pred_check_branch
          %858 = sbr.rel (%p856) target = $region96
        $region95: #{tpu_custom_call.1} parent=91 // pred_region
          %s859 = sand.u32 %s226, 1
          %s860 = scalar_lea.sflag [#allocation4], %s859
          %s861 = sand.u32 %s226, 1
          %s862 = smul.addr %s861, 16
          %s863 = scalar_lea.vmem [#allocation14], %s862
          %864 = dma.done %s860, 256
        $region96: #{tpu_custom_call.1} parent=91 // pred_fallthru
          _
        // Predicated region
        $region97: #{tpu_custom_call.1} parent=91 // pred_check
          %p865 = pneg %p269
        $region98: #{tpu_custom_call.1} parent=91 // pred_check_branch
          %867 = sbr.rel (%p865) target = $region100
        $region99: #{tpu_custom_call.1} parent=91 // pred_region
          %s868 = sand.u32 %s36, 1
          %s869 = scalar_lea.sflag [#allocation16], %s868
          %s870 = sand.u32 %s254, 1
          %s871 = smul.addr %s870, 8
          %s872 = scalar_lea.vmem [#allocation15], %s871
          %873 = dma.done %s869, 128
        $region100: #{tpu_custom_call.1} parent=91 // pred_fallthru
          _
        // Predicated region
        $region101: #{tpu_custom_call.1} parent=91 // pred_check
          %p874 = pneg %p297
        $region102: #{tpu_custom_call.1} parent=91 // pred_check_branch
          %876 = sbr.rel (%p874) target = $region104
        $region103: #{tpu_custom_call.1} parent=91 // pred_region
          %s877 = sand.u32 %s36, 1
          %s878 = scalar_lea.sflag [#allocation16], %s877
          %s879 = sand.u32 %s282, 1
          %s880 = smul.addr %s879, 8
          %s881 = scalar_lea.vmem [#allocation17], %s880
          %882 = dma.done %s878, 128
        $region104: #{tpu_custom_call.1} parent=91 // pred_fallthru
          _
      $region92: #{tpu_custom_call.1} parent=5 // pred_fallthru
        _
    $region6: #{tpu_custom_call.1} parent=1 // loop_footer
      %s34 = sadd.s32 1, %s30
    $region7: #{tpu_custom_call.1} parent=1 // loop_footer_branch
      %29 = sbr.rel target = $region3
    $region8: #{tpu_custom_call.1} parent=1 // loop_exit
      _
    %883 = vsyncpa [#allocation3], 1
    %s884 = scalar_lea.sflag [#allocation3], 1
    %885 = vsyncpa %s884, 1
    %886 = vsyncpa [#allocation6], 1
    %s887 = scalar_lea.sflag [#allocation6], 1
    %888 = vsyncpa %s887, 1
    %889 = vsyncpa [#allocation9], 1
    %890 = vsyncpa [#allocation12], 1
    %891 = vsyncpa [#allocation4], 1
    %s892 = scalar_lea.sflag [#allocation4], 1
    %893 = vsyncpa %s892, 1
    %894 = vsyncpa [#allocation16], 1
    %s895 = scalar_lea.sflag [#allocation16], 1
    %896 = vsyncpa %s895, 1

</llo_original>
